<compile_context>
chip_gen: v7x
topology: tpu7x:2x2x1
jax: 0.10.0
libtpu: 0.0.40
codegen_flags: <defaults>
</compile_context>

<pallas_src>
import jax
import jax.numpy as jnp
from jax.experimental import pallas as pl
from jax.experimental.pallas import tpu as pltpu


def _round_up(n, m):
    return (n + m - 1) // m * m


def _qfc_kernel(xt_ref, at_ref, w1x_ref, w1a_ref, b1_ref, w2_ref, b2_ref,
                w3_ref, b3_ref, o_ref):
    # Layer 1 (feature-major): h1 = relu(W1x @ x^T + W1a @ a^T + b1)  -> (H, TILE_B)
    # bf16 MXU operands, f32 accumulation; bias/ReLU in f32 on the VPU.
    h1 = jnp.dot(w1x_ref[...], xt_ref[...], preferred_element_type=jnp.float32)
    h1 = h1 + jnp.dot(w1a_ref[...], at_ref[...], preferred_element_type=jnp.float32)
    h1 = jnp.maximum(h1 + b1_ref[...], 0.0)          # b1 is (H, 1): lane broadcast

    # Layer 2: (H, H) @ (H, TILE_B) -- matches the 256-wide MXU tile exactly.
    h2 = jnp.dot(w2_ref[...], h1.astype(jnp.bfloat16),
                 preferred_element_type=jnp.float32)
    h2 = jnp.maximum(h2 + b2_ref[...], 0.0)

    # Layer 3 (H -> 1): VPU multiply + sublane reduce instead of an N=1 matmul.
    # Result is (1, TILE_B): lane-dense, no relayout needed before the store.
    y = jnp.sum(h2 * w3_ref[...], axis=0, keepdims=True) + b3_ref[...]
    o_ref[...] = y.astype(o_ref.dtype)


def q_fc_forward(x, a, params, *, tile_b=1024):
    """x: (B, state_size), a: (B, action_size) -> (B,) float32.

    params are in PyTorch nn.Linear layout:
      w1 (H, S+A), b1 (H,), w2 (H, H), b2 (H,), w3 (1, H), b3 (1,)
    """
    w1, b1, w2, b2, w3, b3 = params
    B, S = x.shape
    A = a.shape[1]
    H = w1.shape[0]

    # Batch (lane) tile: multiple of 128 so multi-tile grids satisfy lane tiling;
    # a single tile may equal the (padded) full batch.
    TILE_B = min(tile_b, _round_up(B, 128))
    B_pad = _round_up(B, TILE_B)
    num_tiles = B_pad // TILE_B

    # Pad the small contraction dims for clean bf16 sublane packing (zeros -> no-op).
    S_pad = _round_up(S, 16)
    A_pad = _round_up(A, 16)

    bf16 = jnp.bfloat16
    # Feature-major, zero-padded, bf16 activations. (The transpose is cheap XLA glue;
    # at deployment the caller can keep its batch transposed to avoid it entirely.)
    xt = jnp.zeros((S_pad, B_pad), bf16).at[:S, :B].set(x.T.astype(bf16))
    at = jnp.zeros((A_pad, B_pad), bf16).at[:A, :B].set(a.T.astype(bf16))

    # Split W1 along its input dim (fuses torch.cat into two dots) and cast to bf16.
    w1x = jnp.zeros((H, S_pad), bf16).at[:, :S].set(w1[:, :S].astype(bf16))
    w1a = jnp.zeros((H, A_pad), bf16).at[:, :A].set(w1[:, S:].astype(bf16))
    w2b = w2.astype(bf16)
    b1c = b1.reshape(H, 1).astype(jnp.float32)
    b2c = b2.reshape(H, 1).astype(jnp.float32)
    w3c = w3.reshape(H, 1).astype(jnp.float32)    # fc3 weight as a column (f32)
    b3c = b3.reshape(1, 1).astype(jnp.float32)

    flops = 2 * B_pad * (H * (S_pad + A_pad) + H * H + H)
    bytes_accessed = (
        (xt.size + at.size + w1x.size + w1a.size + w2b.size) * 2     # bf16
        + (b1c.size + b2c.size + w3c.size + b3c.size + B_pad) * 4    # f32
    )

    out = pl.pallas_call(
        _qfc_kernel,
        out_shape=jax.ShapeDtypeStruct((1, B_pad), jnp.float32),
        grid=(num_tiles,),
        in_specs=[
            # Batch-tiled activations (batch in lanes).
            pl.BlockSpec((S_pad, TILE_B), lambda i: (0, i)),
            pl.BlockSpec((A_pad, TILE_B), lambda i: (0, i)),
            # Weights / biases: constant index_map -> DMA'd once, VMEM-resident.
            pl.BlockSpec((H, S_pad), lambda i: (0, 0)),
            pl.BlockSpec((H, A_pad), lambda i: (0, 0)),
            pl.BlockSpec((H, 1), lambda i: (0, 0)),
            pl.BlockSpec((H, H), lambda i: (0, 0)),
            pl.BlockSpec((H, 1), lambda i: (0, 0)),
            pl.BlockSpec((H, 1), lambda i: (0, 0)),
            pl.BlockSpec((1, 1), lambda i: (0, 0)),
        ],
        # Lane-dense output slab: (1, TILE_B) per grid step.
        out_specs=pl.BlockSpec((1, TILE_B), lambda i: (0, i)),
        compiler_params=pltpu.CompilerParams(
            dimension_semantics=("parallel",),
            vmem_limit_bytes=32 * 1024 * 1024,
        ),
        cost_estimate=pl.CostEstimate(
            flops=flops, transcendentals=0, bytes_accessed=bytes_accessed),
    )(xt, at, w1x, w1a, b1c, w2b, b2c, w3c, b3c)

    return out[0, :B]  # .view(-1), padding dropped


def init_params(key, state_size, action_size, hidden=256):
    """Deterministic synthetic init (uniform fan-in bound), PyTorch layout."""
    def linear(k, fan_in, fan_out):
        k_w, k_b = jax.random.split(k)
        bound = 1.0 / jnp.sqrt(fan_in)
        w = jax.random.uniform(k_w, (fan_out, fan_in), jnp.float32, -bound, bound)
        b = jax.random.uniform(k_b, (fan_out,), jnp.float32, -bound, bound)
        return w, b

    k1, k2, k3 = jax.random.split(key, 3)
    w1, b1 = linear(k1, state_size + action_size, hidden)
    w2, b2 = linear(k2, hidden, hidden)
    w3, b3 = linear(k3, hidden, 1)
    return (w1, b1, w2, b2, w3, b3)


if __name__ == "__main__":
    key = jax.random.PRNGKey(0)
    k_x, k_a, k_p = jax.random.split(key, 3)

    batch, state_size, action_size = 8, 24, 8
    x = jax.random.normal(k_x, (batch, state_size), jnp.float32)
    a = jax.random.normal(k_a, (batch, action_size), jnp.float32)
    params = init_params(k_p, state_size, action_size)

    y = q_fc_forward(x, a, params)
    y = jax.block_until_ready(y)

    # Pure-JAX f32 reference (kernel uses bf16 MXU operands -> loose tolerance).
    w1, b1, w2, b2, w3, b3 = params
    xa = jnp.concatenate([x, a], axis=1)
    h1 = jnp.maximum(xa @ w1.T + b1, 0.0)
    h2 = jnp.maximum(h1 @ w2.T + b2, 0.0)
    y_ref = (h2 @ w3.T + b3).reshape(-1)

    assert y.shape == (batch,)
    assert jnp.allclose(y, y_ref, atol=2e-2, rtol=2e-2), (y, y_ref)

    print("KERNEL_OK")
</pallas_src>

<mosaic_0001>
module attributes {stable_mosaic.version = 11 : i64} {
  func.func @_qfc_kernel(%arg0: i32, %arg1: memref<32x128xbf16, #tpu.memory_space<vmem>>, %arg2: memref<16x128xbf16, #tpu.memory_space<vmem>>, %arg3: memref<256x32xbf16, #tpu.memory_space<vmem>>, %arg4: memref<256x16xbf16, #tpu.memory_space<vmem>>, %arg5: memref<256x1xf32, #tpu.memory_space<vmem>>, %arg6: memref<256x256xbf16, #tpu.memory_space<vmem>>, %arg7: memref<256x1xf32, #tpu.memory_space<vmem>>, %arg8: memref<256x1xf32, #tpu.memory_space<vmem>>, %arg9: memref<1x1xf32, #tpu.memory_space<vmem>>, %arg10: memref<1x128xf32, #tpu.memory_space<vmem>>) attributes {dimension_semantics = [#tpu.dimension_semantics<parallel>], iteration_bounds = array<i64: 1>, scalar_prefetch = 0 : i64, scratch_operands = 0 : i64, tpu.core_type = #tpu.core_type<tc>, window_params = [{transform_indices = @transform_0, window_bounds = array<i64: 32, 128>}, {transform_indices = @transform_1, window_bounds = array<i64: 16, 128>}, {pipeline_mode = #tpu.pipeline_mode<synchronous>, transform_indices = @transform_2, window_bounds = array<i64: 256, 32>}, {pipeline_mode = #tpu.pipeline_mode<synchronous>, transform_indices = @transform_3, window_bounds = array<i64: 256, 16>}, {pipeline_mode = #tpu.pipeline_mode<synchronous>, transform_indices = @transform_4, window_bounds = array<i64: 256, 1>}, {pipeline_mode = #tpu.pipeline_mode<synchronous>, transform_indices = @transform_5, window_bounds = array<i64: 256, 256>}, {pipeline_mode = #tpu.pipeline_mode<synchronous>, transform_indices = @transform_6, window_bounds = array<i64: 256, 1>}, {pipeline_mode = #tpu.pipeline_mode<synchronous>, transform_indices = @transform_7, window_bounds = array<i64: 256, 1>}, {pipeline_mode = #tpu.pipeline_mode<synchronous>, transform_indices = @transform_8, window_bounds = array<i64: 1, 1>}, {transform_indices = @transform_9, window_bounds = array<i64: 1, 128>}]} {
    %c0 = arith.constant 0 : index
    %c0_0 = arith.constant 0 : index
    %0 = vector.load %arg3[%c0, %c0_0] : memref<256x32xbf16, #tpu.memory_space<vmem>>, vector<256x32xbf16>
    %c0_1 = arith.constant 0 : index
    %c0_2 = arith.constant 0 : index
    %1 = vector.load %arg1[%c0_1, %c0_2] : memref<32x128xbf16, #tpu.memory_space<vmem>>, vector<32x128xbf16>
    %cst = arith.constant dense<0.000000e+00> : vector<256x128xf32>
    %2 = tpu.matmul %0, %1, %cst {dimension_numbers = #tpu.dot_dimension_numbers<[1], [0], [0], [1], [0, 0, 1, 1], [], []>} : vector<256x32xbf16>, vector<32x128xbf16>, vector<256x128xf32> -> vector<256x128xf32>
    %c0_3 = arith.constant 0 : index
    %c0_4 = arith.constant 0 : index
    %3 = vector.load %arg4[%c0_3, %c0_4] : memref<256x16xbf16, #tpu.memory_space<vmem>>, vector<256x16xbf16>
    %c0_5 = arith.constant 0 : index
    %c0_6 = arith.constant 0 : index
    %4 = vector.load %arg2[%c0_5, %c0_6] : memref<16x128xbf16, #tpu.memory_space<vmem>>, vector<16x128xbf16>
    %cst_7 = arith.constant dense<0.000000e+00> : vector<256x128xf32>
    %5 = tpu.matmul %3, %4, %cst_7 {dimension_numbers = #tpu.dot_dimension_numbers<[1], [0], [0], [1], [0, 0, 1, 1], [], []>} : vector<256x16xbf16>, vector<16x128xbf16>, vector<256x128xf32> -> vector<256x128xf32>
    %6 = arith.addf %2, %5 : vector<256x128xf32>
    %c0_8 = arith.constant 0 : index
    %c0_9 = arith.constant 0 : index
    %7 = vector.load %arg5[%c0_8, %c0_9] : memref<256x1xf32, #tpu.memory_space<vmem>>, vector<256x1xf32>
    %8 = vector.broadcast %7 : vector<256x1xf32> to vector<256x128xf32>
    %9 = arith.addf %6, %8 : vector<256x128xf32>
    %cst_10 = arith.constant 0.000000e+00 : f32
    %10 = vector.broadcast %cst_10 : f32 to vector<256x128xf32>
    %11 = arith.maximumf %9, %10 : vector<256x128xf32>
    %c0_11 = arith.constant 0 : index
    %c0_12 = arith.constant 0 : index
    %12 = vector.load %arg6[%c0_11, %c0_12] : memref<256x256xbf16, #tpu.memory_space<vmem>>, vector<256x256xbf16>
    %13 = arith.truncf %11 : vector<256x128xf32> to vector<256x128xbf16>
    %cst_13 = arith.constant dense<0.000000e+00> : vector<256x128xf32>
    %14 = tpu.matmul %12, %13, %cst_13 {dimension_numbers = #tpu.dot_dimension_numbers<[1], [0], [0], [1], [0, 0, 1, 1], [], []>} : vector<256x256xbf16>, vector<256x128xbf16>, vector<256x128xf32> -> vector<256x128xf32>
    %c0_14 = arith.constant 0 : index
    %c0_15 = arith.constant 0 : index
    %15 = vector.load %arg7[%c0_14, %c0_15] : memref<256x1xf32, #tpu.memory_space<vmem>>, vector<256x1xf32>
    %16 = vector.broadcast %15 : vector<256x1xf32> to vector<256x128xf32>
    %17 = arith.addf %14, %16 : vector<256x128xf32>
    %cst_16 = arith.constant 0.000000e+00 : f32
    %18 = vector.broadcast %cst_16 : f32 to vector<256x128xf32>
    %19 = arith.maximumf %17, %18 : vector<256x128xf32>
    %c0_17 = arith.constant 0 : index
    %c0_18 = arith.constant 0 : index
    %20 = vector.load %arg8[%c0_17, %c0_18] : memref<256x1xf32, #tpu.memory_space<vmem>>, vector<256x1xf32>
    %21 = vector.broadcast %20 : vector<256x1xf32> to vector<256x128xf32>
    %22 = arith.mulf %19, %21 : vector<256x128xf32>
    %cst_19 = arith.constant dense<0.000000e+00> : vector<128xf32>
    %23 = vector.multi_reduction <add>, %22, %cst_19 [0] : vector<256x128xf32> to vector<128xf32>
    %24 = vector.shape_cast %23 : vector<128xf32> to vector<1x128xf32>
    %c0_20 = arith.constant 0 : index
    %c0_21 = arith.constant 0 : index
    %25 = vector.load %arg9[%c0_20, %c0_21] : memref<1x1xf32, #tpu.memory_space<vmem>>, vector<1x1xf32>
    %26 = vector.broadcast %25 : vector<1x1xf32> to vector<1x128xf32>
    %27 = arith.addf %24, %26 : vector<1x128xf32>
    %c0_22 = arith.constant 0 : index
    %c0_23 = arith.constant 0 : index
    %28 = vector.load %arg10[%c0_22, %c0_23] : memref<1x128xf32, #tpu.memory_space<vmem>>, vector<1x128xf32>
    tpu.vector_store %arg10[%c0_22, %c0_23], %27 {strides = array<i32>} : memref<1x128xf32, #tpu.memory_space<vmem>>, vector<1x128xf32>,
    return
  }
  func.func @transform_0(%arg0: i32) -> (i32, i32) {
    %c0_i32 = arith.constant 0 : i32
    %c0_i32_0 = arith.constant 0 : i32
    return %c0_i32, %arg0 : i32, i32
  }
  func.func @transform_1(%arg0: i32) -> (i32, i32) {
    %c0_i32 = arith.constant 0 : i32
    %c0_i32_0 = arith.constant 0 : i32
    return %c0_i32, %arg0 : i32, i32
  }
  func.func @transform_2(%arg0: i32) -> (i32, i32) {
    %c0_i32 = arith.constant 0 : i32
    %c0_i32_0 = arith.constant 0 : i32
    %c0_i32_1 = arith.constant 0 : i32
    return %c0_i32, %c0_i32_0 : i32, i32
  }
  func.func @transform_3(%arg0: i32) -> (i32, i32) {
    %c0_i32 = arith.constant 0 : i32
    %c0_i32_0 = arith.constant 0 : i32
    %c0_i32_1 = arith.constant 0 : i32
    return %c0_i32, %c0_i32_0 : i32, i32
  }
  func.func @transform_4(%arg0: i32) -> (i32, i32) {
    %c0_i32 = arith.constant 0 : i32
    %c0_i32_0 = arith.constant 0 : i32
    %c0_i32_1 = arith.constant 0 : i32
    return %c0_i32, %c0_i32_0 : i32, i32
  }
  func.func @transform_5(%arg0: i32) -> (i32, i32) {
    %c0_i32 = arith.constant 0 : i32
    %c0_i32_0 = arith.constant 0 : i32
    %c0_i32_1 = arith.constant 0 : i32
    return %c0_i32, %c0_i32_0 : i32, i32
  }
  func.func @transform_6(%arg0: i32) -> (i32, i32) {
    %c0_i32 = arith.constant 0 : i32
    %c0_i32_0 = arith.constant 0 : i32
    %c0_i32_1 = arith.constant 0 : i32
    return %c0_i32, %c0_i32_0 : i32, i32
  }
  func.func @transform_7(%arg0: i32) -> (i32, i32) {
    %c0_i32 = arith.constant 0 : i32
    %c0_i32_0 = arith.constant 0 : i32
    %c0_i32_1 = arith.constant 0 : i32
    return %c0_i32, %c0_i32_0 : i32, i32
  }
  func.func @transform_8(%arg0: i32) -> (i32, i32) {
    %c0_i32 = arith.constant 0 : i32
    %c0_i32_0 = arith.constant 0 : i32
    %c0_i32_1 = arith.constant 0 : i32
    return %c0_i32, %c0_i32_0 : i32, i32
  }
  func.func @transform_9(%arg0: i32) -> (i32, i32) {
    %c0_i32 = arith.constant 0 : i32
    %c0_i32_0 = arith.constant 0 : i32
    return %c0_i32, %arg0 : i32, i32
  }
}

</mosaic_0001>

<llo_original>
// kernel: tpu_custom_call.1
$region0: #{tpu_custom_call.1}
  #allocation0 [shape = 'u32[]', space=smem, size = 0x4, offset = 0x4, fixed_abs, tag = 'smem constant byte address 0x4 - core index']
  #allocation1 [shape = 'u32[144,128]{1,0:T(1,128)}', space=vmem, size = 0x12000, scoped, tag = 'internal scratch']
  #allocation2 [shape = 'f32[1,1]{1,0:T(1,128)S(1)}', space=vmem, size = 0x200, scoped, tag = 'scoped memory for tpu_custom_call.1']
  %s0 = inlined_call_operand.vmem [shape: bf16[32,128], index: 0, kind: input, shape index: {}]
  %s1 = inlined_call_operand.vmem [shape: bf16[16,128], index: 1, kind: input, shape index: {}]
  %s2 = inlined_call_operand.vmem [shape: bf16[256,32], index: 2, kind: input, shape index: {}]
  %s3 = inlined_call_operand.vmem [shape: bf16[256,16], index: 3, kind: input, shape index: {}]
  %s4 = inlined_call_operand.vmem [shape: f32[256,1], index: 4, kind: input, shape index: {}]
  %s5 = inlined_call_operand.vmem [shape: bf16[256,256], index: 5, kind: input, shape index: {}]
  %s6 = inlined_call_operand.vmem [shape: f32[256,1], index: 6, kind: input, shape index: {}]
  %s7 = inlined_call_operand.vmem [shape: f32[256,1], index: 7, kind: input, shape index: {}]
  %s8 = inlined_call_operand.<no memory space> [shape: f32[1,1], index: 8, kind: input, shape index: {}]
  %s9 = inlined_call_operand.hbm [shape: f32[1,128], index: 9, kind: output, shape index: {}]
  %s10 = sld [smem:[#allocation0]]
  $region46: #{tpu_custom_call.1} parent=0
    _
  %s12 = ssub.s32 1, %s10
  %s13 = scalar_select 0, %s12, %s10
  %v14 = vstv %s8
  %15 = vst [vmem:[#allocation2] sm:$0x1] %v14
  $region1: #{tpu_custom_call.1} parent=0
    #allocation3 [shape = 'u8[512]{0}', space=vmem, size = 0x400, scoped, tag = 'output window, operand 0, single buffered']
    #allocation4 [shape = 's32[1]{0}', space=sflag, size = 0x4, scoped, tag = 'scoped memory for tpu_custom_call.1']
    %16 = vsyncpa [#allocation4], 0
    // Predicated region
    $region2: #{tpu_custom_call.1} parent=1 // pred_check
      _
    $region3: #{tpu_custom_call.1} parent=1 // pred_check_branch
      %18 = sbr.rel (0) target = $region5
    $region4: #{tpu_custom_call.1} parent=1 // pred_region
      _
    $region5: #{tpu_custom_call.1} parent=1 // pred_fallthru
      _
    // Predicated region
    $region6: #{tpu_custom_call.1} parent=1 // pred_check
      _
    $region7: #{tpu_custom_call.1} parent=1 // pred_check_branch
      %20 = sbr.rel (0) target = $region9
    $region8: #{tpu_custom_call.1} parent=1 // pred_region
      _
    $region9: #{tpu_custom_call.1} parent=1 // pred_fallthru
      _
    // Predicated region
    $region10: #{tpu_custom_call.1} parent=1 // pred_check
      _
    $region11: #{tpu_custom_call.1} parent=1 // pred_check_branch
      %22 = sbr.rel (0) target = $region13
    $region12: #{tpu_custom_call.1} parent=1 // pred_region
      _
    $region13: #{tpu_custom_call.1} parent=1 // pred_fallthru
      _
    // Predicated region
    $region14: #{tpu_custom_call.1} parent=1 // pred_check
      _
    $region15: #{tpu_custom_call.1} parent=1 // pred_check_branch
      %24 = sbr.rel (0) target = $region17
    $region16: #{tpu_custom_call.1} parent=1 // pred_region
      _
    $region17: #{tpu_custom_call.1} parent=1 // pred_fallthru
      _
    // Predicated region
    $region18: #{tpu_custom_call.1} parent=1 // pred_check
      _
    $region19: #{tpu_custom_call.1} parent=1 // pred_check_branch
      %26 = sbr.rel (0) target = $region21
    $region20: #{tpu_custom_call.1} parent=1 // pred_region
      _
    $region21: #{tpu_custom_call.1} parent=1 // pred_fallthru
      _
    // Predicated region
    $region22: #{tpu_custom_call.1} parent=1 // pred_check
      _
    $region23: #{tpu_custom_call.1} parent=1 // pred_check_branch
      %28 = sbr.rel (0) target = $region25
    $region24: #{tpu_custom_call.1} parent=1 // pred_region
      _
    $region25: #{tpu_custom_call.1} parent=1 // pred_fallthru
      _
    // Predicated region
    $region26: #{tpu_custom_call.1} parent=1 // pred_check
      _
    $region27: #{tpu_custom_call.1} parent=1 // pred_check_branch
      %30 = sbr.rel (0) target = $region29
    $region28: #{tpu_custom_call.1} parent=1 // pred_region
      _
    $region29: #{tpu_custom_call.1} parent=1 // pred_fallthru
      _
    // Predicated region
    $region30: #{tpu_custom_call.1} parent=1 // pred_check
      _
    $region31: #{tpu_custom_call.1} parent=1 // pred_check_branch
      %32 = sbr.rel (0) target = $region33
    $region32: #{tpu_custom_call.1} parent=1 // pred_region
      _
    $region33: #{tpu_custom_call.1} parent=1 // pred_fallthru
      _
    // Predicated region
    $region34: #{tpu_custom_call.1} parent=1 // pred_check
      _
    $region35: #{tpu_custom_call.1} parent=1 // pred_check_branch
      %34 = sbr.rel (0) target = $region37
    $region36: #{tpu_custom_call.1} parent=1 // pred_region
      _
    $region37: #{tpu_custom_call.1} parent=1 // pred_fallthru
      _
    %v36 = vld [vmem:[%s2] sm:$0xf]
    %v37 = vld [vmem:[%s2 + $0x4] sm:$0xf]
    %v38 = vld [vmem:[%s2 + $0x8] sm:$0xf]
    %v39 = vld [vmem:[%s2 + $0xc] sm:$0xf]
    %v40 = vld [vmem:[%s2 + $0x10] sm:$0xf]
    %v41 = vld [vmem:[%s2 + $0x14] sm:$0xf]
    %v42 = vld [vmem:[%s2 + $0x18] sm:$0xf]
    %v43 = vld [vmem:[%s2 + $0x1c] sm:$0xf]
    %v44 = vld [vmem:[%s2 + $0x20] sm:$0xf]
    %v45 = vld [vmem:[%s2 + $0x24] sm:$0xf]
    %v46 = vld [vmem:[%s2 + $0x28] sm:$0xf]
    %v47 = vld [vmem:[%s2 + $0x2c] sm:$0xf]
    %v48 = vld [vmem:[%s2 + $0x30] sm:$0xf]
    %v49 = vld [vmem:[%s2 + $0x34] sm:$0xf]
    %v50 = vld [vmem:[%s2 + $0x38] sm:$0xf]
    %v51 = vld [vmem:[%s2 + $0x3c] sm:$0xf]
    %v52 = vld [vmem:[%s2 + $0x40] sm:$0xf]
    %v53 = vld [vmem:[%s2 + $0x44] sm:$0xf]
    %v54 = vld [vmem:[%s2 + $0x48] sm:$0xf]
    %v55 = vld [vmem:[%s2 + $0x4c] sm:$0xf]
    %v56 = vld [vmem:[%s2 + $0x50] sm:$0xf]
    %v57 = vld [vmem:[%s2 + $0x54] sm:$0xf]
    %v58 = vld [vmem:[%s2 + $0x58] sm:$0xf]
    %v59 = vld [vmem:[%s2 + $0x5c] sm:$0xf]
    %v60 = vld [vmem:[%s2 + $0x60] sm:$0xf]
    %v61 = vld [vmem:[%s2 + $0x64] sm:$0xf]
    %v62 = vld [vmem:[%s2 + $0x68] sm:$0xf]
    %v63 = vld [vmem:[%s2 + $0x6c] sm:$0xf]
    %v64 = vld [vmem:[%s2 + $0x70] sm:$0xf]
    %v65 = vld [vmem:[%s2 + $0x74] sm:$0xf]
    %v66 = vld [vmem:[%s2 + $0x78] sm:$0xf]
    %v67 = vld [vmem:[%s2 + $0x7c] sm:$0xf]
    %v68 = vld [vmem:[%s0] sm:$0xf]
    %v69 = vld [vmem:[%s0 + $0x4] sm:$0xf]
    %v70 = vld [vmem:[%s0 + $0x8] sm:$0xf]
    %v71 = vld [vmem:[%s0 + $0xc] sm:$0xf]
    %v72 = vld [vmem:[%s3] sm:$0xf]
    %v73 = vld [vmem:[%s3 + $0x4] sm:$0xf]
    %v74 = vld [vmem:[%s3 + $0x8] sm:$0xf]
    %v75 = vld [vmem:[%s3 + $0xc] sm:$0xf]
    %v76 = vld [vmem:[%s3 + $0x10] sm:$0xf]
    %v77 = vld [vmem:[%s3 + $0x14] sm:$0xf]
    %v78 = vld [vmem:[%s3 + $0x18] sm:$0xf]
    %v79 = vld [vmem:[%s3 + $0x1c] sm:$0xf]
    %v80 = vld [vmem:[%s3 + $0x20] sm:$0xf]
    %v81 = vld [vmem:[%s3 + $0x24] sm:$0xf]
    %v82 = vld [vmem:[%s3 + $0x28] sm:$0xf]
    %v83 = vld [vmem:[%s3 + $0x2c] sm:$0xf]
    %v84 = vld [vmem:[%s3 + $0x30] sm:$0xf]
    %v85 = vld [vmem:[%s3 + $0x34] sm:$0xf]
    %v86 = vld [vmem:[%s3 + $0x38] sm:$0xf]
    %v87 = vld [vmem:[%s3 + $0x3c] sm:$0xf]
    %v88 = vld [vmem:[%s3 + $0x40] sm:$0xf]
    %v89 = vld [vmem:[%s3 + $0x44] sm:$0xf]
    %v90 = vld [vmem:[%s3 + $0x48] sm:$0xf]
    %v91 = vld [vmem:[%s3 + $0x4c] sm:$0xf]
    %v92 = vld [vmem:[%s3 + $0x50] sm:$0xf]
    %v93 = vld [vmem:[%s3 + $0x54] sm:$0xf]
    %v94 = vld [vmem:[%s3 + $0x58] sm:$0xf]
    %v95 = vld [vmem:[%s3 + $0x5c] sm:$0xf]
    %v96 = vld [vmem:[%s3 + $0x60] sm:$0xf]
    %v97 = vld [vmem:[%s3 + $0x64] sm:$0xf]
    %v98 = vld [vmem:[%s3 + $0x68] sm:$0xf]
    %v99 = vld [vmem:[%s3 + $0x6c] sm:$0xf]
    %v100 = vld [vmem:[%s3 + $0x70] sm:$0xf]
    %v101 = vld [vmem:[%s3 + $0x74] sm:$0xf]
    %v102 = vld [vmem:[%s3 + $0x78] sm:$0xf]
    %v103 = vld [vmem:[%s3 + $0x7c] sm:$0xf]
    %v104 = vld [vmem:[%s1] sm:$0xf]
    %v105 = vld [vmem:[%s1 + $0x4] sm:$0xf]
    %v138 = vunpack.c.l.b16 %v72
    %v139 = vunpack.c.l.b16 %v73
    %v140 = vunpack.c.l.b16 %v74
    %v141 = vunpack.c.l.b16 %v75
    %v142 = vunpack.c.l.b16 %v76
    %v143 = vunpack.c.l.b16 %v77
    %v144 = vunpack.c.l.b16 %v78
    %v145 = vunpack.c.l.b16 %v79
    %v146 = vunpack.c.l.b16 %v80
    %v147 = vunpack.c.l.b16 %v81
    %v148 = vunpack.c.l.b16 %v82
    %v149 = vunpack.c.l.b16 %v83
    %v150 = vunpack.c.l.b16 %v84
    %v151 = vunpack.c.l.b16 %v85
    %v152 = vunpack.c.l.b16 %v86
    %v153 = vunpack.c.l.b16 %v87
    %v154 = vunpack.c.l.b16 %v88
    %v155 = vunpack.c.l.b16 %v89
    %v156 = vunpack.c.l.b16 %v90
    %v157 = vunpack.c.l.b16 %v91
    %v158 = vunpack.c.l.b16 %v92
    %v159 = vunpack.c.l.b16 %v93
    %v160 = vunpack.c.l.b16 %v94
    %v161 = vunpack.c.l.b16 %v95
    %v162 = vunpack.c.l.b16 %v96
    %v163 = vunpack.c.l.b16 %v97
    %v164 = vunpack.c.l.b16 %v98
    %v165 = vunpack.c.l.b16 %v99
    %v166 = vunpack.c.l.b16 %v100
    %v167 = vunpack.c.l.b16 %v101
    %v168 = vunpack.c.l.b16 %v102
    %v169 = vunpack.c.l.b16 %v103
    %v170 = vpack.c.b16 %v139, %v138
    %v171 = vpack.c.b16 %v141, %v140
    %v172 = vpack.c.b16 %v143, %v142
    %v173 = vpack.c.b16 %v145, %v144
    %v174 = vpack.c.b16 %v147, %v146
    %v175 = vpack.c.b16 %v149, %v148
    %v176 = vpack.c.b16 %v151, %v150
    %v177 = vpack.c.b16 %v153, %v152
    %v178 = vpack.c.b16 %v155, %v154
    %v179 = vpack.c.b16 %v157, %v156
    %v180 = vpack.c.b16 %v159, %v158
    %v181 = vpack.c.b16 %v161, %v160
    %v182 = vpack.c.b16 %v163, %v162
    %v183 = vpack.c.b16 %v165, %v164
    %v184 = vpack.c.b16 %v167, %v166
    %v185 = vpack.c.b16 %v169, %v168
    %v188 = vunpack.c.l.b16 %v104
    %v189 = vunpack.c.l.b16 %v105
    %v190 = vpack.c.b16 %v189, %v188
    %vm192 = vcmask 130048
    %v194 = vsel %vm192, %v170, 0
    %v197 = vsel %vm192, %v171, 0
    %v200 = vsel %vm192, %v172, 0
    %v203 = vsel %vm192, %v173, 0
    %v206 = vsel %vm192, %v174, 0
    %v209 = vsel %vm192, %v175, 0
    %v212 = vsel %vm192, %v176, 0
    %v215 = vsel %vm192, %v177, 0
    %v218 = vsel %vm192, %v178, 0
    %v221 = vsel %vm192, %v179, 0
    %v224 = vsel %vm192, %v180, 0
    %v227 = vsel %vm192, %v181, 0
    %v230 = vsel %vm192, %v182, 0
    %v233 = vsel %vm192, %v183, 0
    %v236 = vsel %vm192, %v184, 0
    %v239 = vsel %vm192, %v185, 0
    %241 = vmatprep.subr.bf16.mxu0 0
    %242 = vmatpush1.bf16.msra.mxu0 %v190
    %243 = vmatprep.subr.bf16.mxu0 0
    %244 = vmatpush1.bf16.msra.mxu0 0
    %245 = vmatprep.subr.bf16.mxu0 0
    %246 = vmatpush1.bf16.msra.mxu0 0
    %247 = vmatprep.subr.bf16.mxu0 0
    %248 = vmatpush1.bf16.msra.mxu0 0
    %249 = vmatprep.subr.bf16.mxu0 0
    %250 = vmatpush1.bf16.msra.mxu0 0
    %251 = vmatprep.subr.bf16.mxu0 0
    %252 = vmatpush1.bf16.msra.mxu0 0
    %253 = vmatprep.subr.bf16.mxu0 0
    %254 = vmatpush1.bf16.msra.mxu0 0
    %255 = vmatprep.subr.bf16.mxu0 0
    %256 = vmatpush1.bf16.msra.mxu0 0
    %257 = vmatprep.subr.bf16.mxu0 0
    %258 = vmatpush1.bf16.msra.mxu0 0
    %259 = vmatprep.subr.bf16.mxu0 0
    %260 = vmatpush1.bf16.msra.mxu0 0
    %261 = vmatprep.subr.bf16.mxu0 0
    %262 = vmatpush1.bf16.msra.mxu0 0
    %263 = vmatprep.subr.bf16.mxu0 0
    %264 = vmatpush1.bf16.msra.mxu0 0
    %265 = vmatprep.subr.bf16.mxu0 0
    %266 = vmatpush1.bf16.msra.mxu0 0
    %267 = vmatprep.subr.bf16.mxu0 0
    %268 = vmatpush1.bf16.msra.mxu0 0
    %269 = vmatprep.subr.bf16.mxu0 0
    %270 = vmatpush1.bf16.msra.mxu0 0
    %271 = vmatprep.subr.bf16.mxu0 0
    %272 = vmatpush1.bf16.msra.mxu0 0
    %273 = vmatprep.mubr.bf16.mxu0 0
    %274 = vmatmul.mubr.bf16.gmra.mrb[0].mxu0 %v194
    %v275 = vpop.f32.mrb[0].mxu0
    %v276 = vadd.f32 0.0, %v275
    %v277 = vpop.f32.mrb[0].mxu0
    %v278 = vpop.f32.mrb[0].mxu0
    %v279 = vadd.f32 0.0, %v278
    %v280 = vpop.f32.mrb[0].mxu0
    %281 = vmatprep.mubr.bf16.mxu0 0
    %282 = vmatmul.mubr.bf16.gmra.mrb[0].mxu0 %v197
    %v283 = vpop.f32.mrb[0].mxu0
    %v284 = vadd.f32 0.0, %v283
    %v285 = vpop.f32.mrb[0].mxu0
    %v286 = vpop.f32.mrb[0].mxu0
    %v287 = vadd.f32 0.0, %v286
    %v288 = vpop.f32.mrb[0].mxu0
    %289 = vmatprep.mubr.bf16.mxu0 0
    %290 = vmatmul.mubr.bf16.gmra.mrb[0].mxu0 %v200
    %v291 = vpop.f32.mrb[0].mxu0
    %v292 = vadd.f32 0.0, %v291
    %v293 = vpop.f32.mrb[0].mxu0
    %v294 = vpop.f32.mrb[0].mxu0
    %v295 = vadd.f32 0.0, %v294
    %v296 = vpop.f32.mrb[0].mxu0
    %297 = vmatprep.mubr.bf16.mxu0 0
    %298 = vmatmul.mubr.bf16.gmra.mrb[0].mxu0 %v203
    %v299 = vpop.f32.mrb[0].mxu0
    %v300 = vadd.f32 0.0, %v299
    %v301 = vpop.f32.mrb[0].mxu0
    %v302 = vpop.f32.mrb[0].mxu0
    %v303 = vadd.f32 0.0, %v302
    %v304 = vpop.f32.mrb[0].mxu0
    %305 = vmatprep.mubr.bf16.mxu0 0
    %306 = vmatmul.mubr.bf16.gmra.mrb[0].mxu0 %v206
    %v307 = vpop.f32.mrb[0].mxu0
    %v308 = vadd.f32 0.0, %v307
    %v309 = vpop.f32.mrb[0].mxu0
    %v310 = vpop.f32.mrb[0].mxu0
    %v311 = vadd.f32 0.0, %v310
    %v312 = vpop.f32.mrb[0].mxu0
    %313 = vmatprep.mubr.bf16.mxu0 0
    %314 = vmatmul.mubr.bf16.gmra.mrb[0].mxu0 %v209
    %v315 = vpop.f32.mrb[0].mxu0
    %v316 = vadd.f32 0.0, %v315
    %v317 = vpop.f32.mrb[0].mxu0
    %v318 = vpop.f32.mrb[0].mxu0
    %v319 = vadd.f32 0.0, %v318
    %v320 = vpop.f32.mrb[0].mxu0
    %321 = vmatprep.mubr.bf16.mxu0 0
    %322 = vmatmul.mubr.bf16.gmra.mrb[0].mxu0 %v212
    %v323 = vpop.f32.mrb[0].mxu0
    %v324 = vadd.f32 0.0, %v323
    %v325 = vpop.f32.mrb[0].mxu0
    %v326 = vpop.f32.mrb[0].mxu0
    %v327 = vadd.f32 0.0, %v326
    %v328 = vpop.f32.mrb[0].mxu0
    %329 = vmatprep.mubr.bf16.mxu0 0
    %330 = vmatmul.mubr.bf16.gmra.mrb[0].mxu0 %v215
    %v331 = vpop.f32.mrb[0].mxu0
    %v332 = vadd.f32 0.0, %v331
    %v333 = vpop.f32.mrb[0].mxu0
    %v334 = vpop.f32.mrb[0].mxu0
    %v335 = vadd.f32 0.0, %v334
    %v336 = vpop.f32.mrb[0].mxu0
    %337 = vmatprep.mubr.bf16.mxu0 0
    %338 = vmatmul.mubr.bf16.gmra.mrb[0].mxu0 %v218
    %v339 = vpop.f32.mrb[0].mxu0
    %v340 = vadd.f32 0.0, %v339
    %v341 = vpop.f32.mrb[0].mxu0
    %v342 = vpop.f32.mrb[0].mxu0
    %v343 = vadd.f32 0.0, %v342
    %v344 = vpop.f32.mrb[0].mxu0
    %345 = vmatprep.mubr.bf16.mxu0 0
    %346 = vmatmul.mubr.bf16.gmra.mrb[0].mxu0 %v221
    %v347 = vpop.f32.mrb[0].mxu0
    %v348 = vadd.f32 0.0, %v347
    %v349 = vpop.f32.mrb[0].mxu0
    %v350 = vpop.f32.mrb[0].mxu0
    %v351 = vadd.f32 0.0, %v350
    %v352 = vpop.f32.mrb[0].mxu0
    %353 = vmatprep.mubr.bf16.mxu0 0
    %354 = vmatmul.mubr.bf16.gmra.mrb[0].mxu0 %v224
    %v355 = vpop.f32.mrb[0].mxu0
    %v356 = vadd.f32 0.0, %v355
    %v357 = vpop.f32.mrb[0].mxu0
    %v358 = vpop.f32.mrb[0].mxu0
    %v359 = vadd.f32 0.0, %v358
    %v360 = vpop.f32.mrb[0].mxu0
    %361 = vmatprep.mubr.bf16.mxu0 0
    %362 = vmatmul.mubr.bf16.gmra.mrb[0].mxu0 %v227
    %v363 = vpop.f32.mrb[0].mxu0
    %v364 = vadd.f32 0.0, %v363
    %v365 = vpop.f32.mrb[0].mxu0
    %v366 = vpop.f32.mrb[0].mxu0
    %v367 = vadd.f32 0.0, %v366
    %v368 = vpop.f32.mrb[0].mxu0
    %369 = vmatprep.mubr.bf16.mxu0 0
    %370 = vmatmul.mubr.bf16.gmra.mrb[0].mxu0 %v230
    %v371 = vpop.f32.mrb[0].mxu0
    %v372 = vadd.f32 0.0, %v371
    %v373 = vpop.f32.mrb[0].mxu0
    %v374 = vpop.f32.mrb[0].mxu0
    %v375 = vadd.f32 0.0, %v374
    %v376 = vpop.f32.mrb[0].mxu0
    %377 = vmatprep.mubr.bf16.mxu0 0
    %378 = vmatmul.mubr.bf16.gmra.mrb[0].mxu0 %v233
    %v379 = vpop.f32.mrb[0].mxu0
    %v380 = vadd.f32 0.0, %v379
    %v381 = vpop.f32.mrb[0].mxu0
    %v382 = vpop.f32.mrb[0].mxu0
    %v383 = vadd.f32 0.0, %v382
    %v384 = vpop.f32.mrb[0].mxu0
    %385 = vmatprep.mubr.bf16.mxu0 0
    %386 = vmatmul.mubr.bf16.gmra.mrb[0].mxu0 %v236
    %v387 = vpop.f32.mrb[0].mxu0
    %v388 = vadd.f32 0.0, %v387
    %v389 = vpop.f32.mrb[0].mxu0
    %v390 = vpop.f32.mrb[0].mxu0
    %v391 = vadd.f32 0.0, %v390
    %v392 = vpop.f32.mrb[0].mxu0
    %393 = vmatprep.mubr.bf16.mxu0 0
    %394 = vmatmul.mubr.bf16.gmra.mrb[0].mxu0 %v239
    %v395 = vpop.f32.mrb[0].mxu0
    %v396 = vadd.f32 0.0, %v395
    %v397 = vpop.f32.mrb[0].mxu0
    %v398 = vpop.f32.mrb[0].mxu0
    %v399 = vadd.f32 0.0, %v398
    %v400 = vpop.f32.mrb[0].mxu0
    %401 = vdwg.mxu0
    %v434 = vunpack.c.l.b16 %v36
    %v435 = vunpack.c.l.b16 %v37
    %v436 = vunpack.c.l.b16 %v38
    %v437 = vunpack.c.l.b16 %v39
    %v438 = vunpack.c.l.b16 %v40
    %v439 = vunpack.c.l.b16 %v41
    %v440 = vunpack.c.l.b16 %v42
    %v441 = vunpack.c.l.b16 %v43
    %v442 = vunpack.c.l.b16 %v44
    %v443 = vunpack.c.l.b16 %v45
    %v444 = vunpack.c.l.b16 %v46
    %v445 = vunpack.c.l.b16 %v47
    %v446 = vunpack.c.l.b16 %v48
    %v447 = vunpack.c.l.b16 %v49
    %v448 = vunpack.c.l.b16 %v50
    %v449 = vunpack.c.l.b16 %v51
    %v450 = vunpack.c.l.b16 %v52
    %v451 = vunpack.c.l.b16 %v53
    %v452 = vunpack.c.l.b16 %v54
    %v453 = vunpack.c.l.b16 %v55
    %v454 = vunpack.c.l.b16 %v56
    %v455 = vunpack.c.l.b16 %v57
    %v456 = vunpack.c.l.b16 %v58
    %v457 = vunpack.c.l.b16 %v59
    %v458 = vunpack.c.l.b16 %v60
    %v459 = vunpack.c.l.b16 %v61
    %v460 = vunpack.c.l.b16 %v62
    %v461 = vunpack.c.l.b16 %v63
    %v462 = vunpack.c.l.b16 %v64
    %v463 = vunpack.c.l.b16 %v65
    %v464 = vunpack.c.l.b16 %v66
    %v465 = vunpack.c.l.b16 %v67
    %v466 = vpack.c.b16 %v435, %v434
    %v467 = vpack.c.b16 %v437, %v436
    %v468 = vpack.c.b16 %v439, %v438
    %v469 = vpack.c.b16 %v441, %v440
    %v470 = vpack.c.b16 %v443, %v442
    %v471 = vpack.c.b16 %v445, %v444
    %v472 = vpack.c.b16 %v447, %v446
    %v473 = vpack.c.b16 %v449, %v448
    %v474 = vpack.c.b16 %v451, %v450
    %v475 = vpack.c.b16 %v453, %v452
    %v476 = vpack.c.b16 %v455, %v454
    %v477 = vpack.c.b16 %v457, %v456
    %v478 = vpack.c.b16 %v459, %v458
    %v479 = vpack.c.b16 %v461, %v460
    %v480 = vpack.c.b16 %v463, %v462
    %v481 = vpack.c.b16 %v465, %v464
    %v486 = vunpack.c.l.b16 %v68
    %v487 = vunpack.c.l.b16 %v69
    %v488 = vunpack.c.l.b16 %v70
    %v489 = vunpack.c.l.b16 %v71
    %v490 = vpack.c.b16 %v487, %v486
    %v491 = vpack.c.b16 %v489, %v488
    %vm494 = vcmask 261120
    %v496 = vsel %vm494, %v466, 0
    %v499 = vsel %vm494, %v467, 0
    %v502 = vsel %vm494, %v468, 0
    %v505 = vsel %vm494, %v469, 0
    %v508 = vsel %vm494, %v470, 0
    %v511 = vsel %vm494, %v471, 0
    %v514 = vsel %vm494, %v472, 0
    %v517 = vsel %vm494, %v473, 0
    %v520 = vsel %vm494, %v474, 0
    %v523 = vsel %vm494, %v475, 0
    %v526 = vsel %vm494, %v476, 0
    %v529 = vsel %vm494, %v477, 0
    %v532 = vsel %vm494, %v478, 0
    %v535 = vsel %vm494, %v479, 0
    %v538 = vsel %vm494, %v480, 0
    %v541 = vsel %vm494, %v481, 0
    %543 = vmatprep.subr.bf16.mxu0 0
    %544 = vmatpush1.bf16.msra.mxu0 %v490
    %545 = vmatprep.subr.bf16.mxu0 0
    %546 = vmatpush1.bf16.msra.mxu0 %v491
    %547 = vmatprep.subr.bf16.mxu0 0
    %548 = vmatpush1.bf16.msra.mxu0 0
    %549 = vmatprep.subr.bf16.mxu0 0
    %550 = vmatpush1.bf16.msra.mxu0 0
    %551 = vmatprep.subr.bf16.mxu0 0
    %552 = vmatpush1.bf16.msra.mxu0 0
    %553 = vmatprep.subr.bf16.mxu0 0
    %554 = vmatpush1.bf16.msra.mxu0 0
    %555 = vmatprep.subr.bf16.mxu0 0
    %556 = vmatpush1.bf16.msra.mxu0 0
    %557 = vmatprep.subr.bf16.mxu0 0
    %558 = vmatpush1.bf16.msra.mxu0 0
    %559 = vmatprep.subr.bf16.mxu0 0
    %560 = vmatpush1.bf16.msra.mxu0 0
    %561 = vmatprep.subr.bf16.mxu0 0
    %562 = vmatpush1.bf16.msra.mxu0 0
    %563 = vmatprep.subr.bf16.mxu0 0
    %564 = vmatpush1.bf16.msra.mxu0 0
    %565 = vmatprep.subr.bf16.mxu0 0
    %566 = vmatpush1.bf16.msra.mxu0 0
    %567 = vmatprep.subr.bf16.mxu0 0
    %568 = vmatpush1.bf16.msra.mxu0 0
    %569 = vmatprep.subr.bf16.mxu0 0
    %570 = vmatpush1.bf16.msra.mxu0 0
    %571 = vmatprep.subr.bf16.mxu0 0
    %572 = vmatpush1.bf16.msra.mxu0 0
    %573 = vmatprep.subr.bf16.mxu0 0
    %574 = vmatpush1.bf16.msra.mxu0 0
    %575 = vmatprep.mubr.bf16.mxu0 0
    %576 = vmatmul.mubr.bf16.gmra.mrb[0].mxu0 %v496
    %v577 = vpop.f32.mrb[0].mxu0
    %v578 = vadd.f32 %v276, %v577
    %v579 = vpop.f32.mrb[0].mxu0
    %v580 = vpop.f32.mrb[0].mxu0
    %v581 = vadd.f32 %v279, %v580
    %v582 = vpop.f32.mrb[0].mxu0
    %583 = vmatprep.mubr.bf16.mxu0 0
    %584 = vmatmul.mubr.bf16.gmra.mrb[0].mxu0 %v499
    %v585 = vpop.f32.mrb[0].mxu0
    %v586 = vadd.f32 %v284, %v585
    %v587 = vpop.f32.mrb[0].mxu0
    %v588 = vpop.f32.mrb[0].mxu0
    %v589 = vadd.f32 %v287, %v588
    %v590 = vpop.f32.mrb[0].mxu0
    %591 = vmatprep.mubr.bf16.mxu0 0
    %592 = vmatmul.mubr.bf16.gmra.mrb[0].mxu0 %v502
    %v593 = vpop.f32.mrb[0].mxu0
    %v594 = vadd.f32 %v292, %v593
    %v595 = vpop.f32.mrb[0].mxu0
    %v596 = vpop.f32.mrb[0].mxu0
    %v597 = vadd.f32 %v295, %v596
    %v598 = vpop.f32.mrb[0].mxu0
    %599 = vmatprep.mubr.bf16.mxu0 0
    %600 = vmatmul.mubr.bf16.gmra.mrb[0].mxu0 %v505
    %v601 = vpop.f32.mrb[0].mxu0
    %v602 = vadd.f32 %v300, %v601
    %v603 = vpop.f32.mrb[0].mxu0
    %v604 = vpop.f32.mrb[0].mxu0
    %v605 = vadd.f32 %v303, %v604
    %v606 = vpop.f32.mrb[0].mxu0
    %607 = vmatprep.mubr.bf16.mxu0 0
    %608 = vmatmul.mubr.bf16.gmra.mrb[0].mxu0 %v508
    %v609 = vpop.f32.mrb[0].mxu0
    %v610 = vadd.f32 %v308, %v609
    %v611 = vpop.f32.mrb[0].mxu0
    %v612 = vpop.f32.mrb[0].mxu0
    %v613 = vadd.f32 %v311, %v612
    %v614 = vpop.f32.mrb[0].mxu0
    %615 = vmatprep.mubr.bf16.mxu0 0
    %616 = vmatmul.mubr.bf16.gmra.mrb[0].mxu0 %v511
    %v617 = vpop.f32.mrb[0].mxu0
    %v618 = vadd.f32 %v316, %v617
    %v619 = vpop.f32.mrb[0].mxu0
    %v620 = vpop.f32.mrb[0].mxu0
    %v621 = vadd.f32 %v319, %v620
    %v622 = vpop.f32.mrb[0].mxu0
    %623 = vmatprep.mubr.bf16.mxu0 0
    %624 = vmatmul.mubr.bf16.gmra.mrb[0].mxu0 %v514
    %v625 = vpop.f32.mrb[0].mxu0
    %v626 = vadd.f32 %v324, %v625
    %v627 = vpop.f32.mrb[0].mxu0
    %v628 = vpop.f32.mrb[0].mxu0
    %v629 = vadd.f32 %v327, %v628
    %v630 = vpop.f32.mrb[0].mxu0
    %631 = vmatprep.mubr.bf16.mxu0 0
    %632 = vmatmul.mubr.bf16.gmra.mrb[0].mxu0 %v517
    %v633 = vpop.f32.mrb[0].mxu0
    %v634 = vadd.f32 %v332, %v633
    %v635 = vpop.f32.mrb[0].mxu0
    %v636 = vpop.f32.mrb[0].mxu0
    %v637 = vadd.f32 %v335, %v636
    %v638 = vpop.f32.mrb[0].mxu0
    %639 = vmatprep.mubr.bf16.mxu0 0
    %640 = vmatmul.mubr.bf16.gmra.mrb[0].mxu0 %v520
    %v641 = vpop.f32.mrb[0].mxu0
    %v642 = vadd.f32 %v340, %v641
    %v643 = vpop.f32.mrb[0].mxu0
    %v644 = vpop.f32.mrb[0].mxu0
    %v645 = vadd.f32 %v343, %v644
    %v646 = vpop.f32.mrb[0].mxu0
    %647 = vmatprep.mubr.bf16.mxu0 0
    %648 = vmatmul.mubr.bf16.gmra.mrb[0].mxu0 %v523
    %v649 = vpop.f32.mrb[0].mxu0
    %v650 = vadd.f32 %v348, %v649
    %v651 = vpop.f32.mrb[0].mxu0
    %v652 = vpop.f32.mrb[0].mxu0
    %v653 = vadd.f32 %v351, %v652
    %v654 = vpop.f32.mrb[0].mxu0
    %655 = vmatprep.mubr.bf16.mxu0 0
    %656 = vmatmul.mubr.bf16.gmra.mrb[0].mxu0 %v526
    %v657 = vpop.f32.mrb[0].mxu0
    %v658 = vadd.f32 %v356, %v657
    %v659 = vpop.f32.mrb[0].mxu0
    %v660 = vpop.f32.mrb[0].mxu0
    %v661 = vadd.f32 %v359, %v660
    %v662 = vpop.f32.mrb[0].mxu0
    %663 = vmatprep.mubr.bf16.mxu0 0
    %664 = vmatmul.mubr.bf16.gmra.mrb[0].mxu0 %v529
    %v665 = vpop.f32.mrb[0].mxu0
    %v666 = vadd.f32 %v364, %v665
    %v667 = vpop.f32.mrb[0].mxu0
    %v668 = vpop.f32.mrb[0].mxu0
    %v669 = vadd.f32 %v367, %v668
    %v670 = vpop.f32.mrb[0].mxu0
    %671 = vmatprep.mubr.bf16.mxu0 0
    %672 = vmatmul.mubr.bf16.gmra.mrb[0].mxu0 %v532
    %v673 = vpop.f32.mrb[0].mxu0
    %v674 = vadd.f32 %v372, %v673
    %v675 = vpop.f32.mrb[0].mxu0
    %v676 = vpop.f32.mrb[0].mxu0
    %v677 = vadd.f32 %v375, %v676
    %v678 = vpop.f32.mrb[0].mxu0
    %679 = vmatprep.mubr.bf16.mxu0 0
    %680 = vmatmul.mubr.bf16.gmra.mrb[0].mxu0 %v535
    %v681 = vpop.f32.mrb[0].mxu0
    %v682 = vadd.f32 %v380, %v681
    %v683 = vpop.f32.mrb[0].mxu0
    %v684 = vpop.f32.mrb[0].mxu0
    %v685 = vadd.f32 %v383, %v684
    %v686 = vpop.f32.mrb[0].mxu0
    %687 = vmatprep.mubr.bf16.mxu0 0
    %688 = vmatmul.mubr.bf16.gmra.mrb[0].mxu0 %v538
    %v689 = vpop.f32.mrb[0].mxu0
    %v690 = vadd.f32 %v388, %v689
    %v691 = vpop.f32.mrb[0].mxu0
    %v692 = vpop.f32.mrb[0].mxu0
    %v693 = vadd.f32 %v391, %v692
    %v694 = vpop.f32.mrb[0].mxu0
    %695 = vmatprep.mubr.bf16.mxu0 0
    %696 = vmatmul.mubr.bf16.gmra.mrb[0].mxu0 %v541
    %v697 = vpop.f32.mrb[0].mxu0
    %v698 = vadd.f32 %v396, %v697
    %v699 = vpop.f32.mrb[0].mxu0
    %v700 = vpop.f32.mrb[0].mxu0
    %v701 = vadd.f32 %v399, %v700
    %v702 = vpop.f32.mrb[0].mxu0
    %703 = vdwg.mxu0
    %v704 = vld [vmem:[%s4] sm:$0xff]
    %v705 = vld [vmem:[%s4 + $0x8] sm:$0xff]
    %v706 = vld [vmem:[%s4 + $0x10] sm:$0xff]
    %v707 = vld [vmem:[%s4 + $0x18] sm:$0xff]
    %v708 = vld [vmem:[%s4 + $0x20] sm:$0xff]
    %v709 = vld [vmem:[%s4 + $0x28] sm:$0xff]
    %v710 = vld [vmem:[%s4 + $0x30] sm:$0xff]
    %v711 = vld [vmem:[%s4 + $0x38] sm:$0xff]
    %v712 = vld [vmem:[%s4 + $0x40] sm:$0xff]
    %v713 = vld [vmem:[%s4 + $0x48] sm:$0xff]
    %v714 = vld [vmem:[%s4 + $0x50] sm:$0xff]
    %v715 = vld [vmem:[%s4 + $0x58] sm:$0xff]
    %v716 = vld [vmem:[%s4 + $0x60] sm:$0xff]
    %v717 = vld [vmem:[%s4 + $0x68] sm:$0xff]
    %v718 = vld [vmem:[%s4 + $0x70] sm:$0xff]
    %v719 = vld [vmem:[%s4 + $0x78] sm:$0xff]
    %v720 = vld [vmem:[%s4 + $0x80] sm:$0xff]
    %v721 = vld [vmem:[%s4 + $0x88] sm:$0xff]
    %v722 = vld [vmem:[%s4 + $0x90] sm:$0xff]
    %v723 = vld [vmem:[%s4 + $0x98] sm:$0xff]
    %v724 = vld [vmem:[%s4 + $0xa0] sm:$0xff]
    %v725 = vld [vmem:[%s4 + $0xa8] sm:$0xff]
    %v726 = vld [vmem:[%s4 + $0xb0] sm:$0xff]
    %v727 = vld [vmem:[%s4 + $0xb8] sm:$0xff]
    %v728 = vld [vmem:[%s4 + $0xc0] sm:$0xff]
    %v729 = vld [vmem:[%s4 + $0xc8] sm:$0xff]
    %v730 = vld [vmem:[%s4 + $0xd0] sm:$0xff]
    %v731 = vld [vmem:[%s4 + $0xd8] sm:$0xff]
    %v732 = vld [vmem:[%s4 + $0xe0] sm:$0xff]
    %v733 = vld [vmem:[%s4 + $0xe8] sm:$0xff]
    %v734 = vld [vmem:[%s4 + $0xf0] sm:$0xff]
    %v735 = vld [vmem:[%s4 + $0xf8] sm:$0xff]
    %737 = vset.pattern.permute.xlu0 0
    %738 = vperm.xlu0 %737, %v704
    %v739 = vpop.permute.xlu0 %738
    %742 = vset.pattern.permute.xlu0 0
    %743 = vperm.xlu0 %742, %v705
    %v744 = vpop.permute.xlu0 %743
    %747 = vset.pattern.permute.xlu0 0
    %748 = vperm.xlu0 %747, %v706
    %v749 = vpop.permute.xlu0 %748
    %752 = vset.pattern.permute.xlu0 0
    %753 = vperm.xlu0 %752, %v707
    %v754 = vpop.permute.xlu0 %753
    %757 = vset.pattern.permute.xlu0 0
    %758 = vperm.xlu0 %757, %v708
    %v759 = vpop.permute.xlu0 %758
    %762 = vset.pattern.permute.xlu0 0
    %763 = vperm.xlu0 %762, %v709
    %v764 = vpop.permute.xlu0 %763
    %767 = vset.pattern.permute.xlu0 0
    %768 = vperm.xlu0 %767, %v710
    %v769 = vpop.permute.xlu0 %768
    %772 = vset.pattern.permute.xlu0 0
    %773 = vperm.xlu0 %772, %v711
    %v774 = vpop.permute.xlu0 %773
    %777 = vset.pattern.permute.xlu0 0
    %778 = vperm.xlu0 %777, %v712
    %v779 = vpop.permute.xlu0 %778
    %782 = vset.pattern.permute.xlu0 0
    %783 = vperm.xlu0 %782, %v713
    %v784 = vpop.permute.xlu0 %783
    %787 = vset.pattern.permute.xlu0 0
    %788 = vperm.xlu0 %787, %v714
    %v789 = vpop.permute.xlu0 %788
    %792 = vset.pattern.permute.xlu0 0
    %793 = vperm.xlu0 %792, %v715
    %v794 = vpop.permute.xlu0 %793
    %797 = vset.pattern.permute.xlu0 0
    %798 = vperm.xlu0 %797, %v716
    %v799 = vpop.permute.xlu0 %798
    %802 = vset.pattern.permute.xlu0 0
    %803 = vperm.xlu0 %802, %v717
    %v804 = vpop.permute.xlu0 %803
    %807 = vset.pattern.permute.xlu0 0
    %808 = vperm.xlu0 %807, %v718
    %v809 = vpop.permute.xlu0 %808
    %812 = vset.pattern.permute.xlu0 0
    %813 = vperm.xlu0 %812, %v719
    %v814 = vpop.permute.xlu0 %813
    %817 = vset.pattern.permute.xlu0 0
    %818 = vperm.xlu0 %817, %v720
    %v819 = vpop.permute.xlu0 %818
    %822 = vset.pattern.permute.xlu0 0
    %823 = vperm.xlu0 %822, %v721
    %v824 = vpop.permute.xlu0 %823
    %827 = vset.pattern.permute.xlu0 0
    %828 = vperm.xlu0 %827, %v722
    %v829 = vpop.permute.xlu0 %828
    %832 = vset.pattern.permute.xlu0 0
    %833 = vperm.xlu0 %832, %v723
    %v834 = vpop.permute.xlu0 %833
    %837 = vset.pattern.permute.xlu0 0
    %838 = vperm.xlu0 %837, %v724
    %v839 = vpop.permute.xlu0 %838
    %842 = vset.pattern.permute.xlu0 0
    %843 = vperm.xlu0 %842, %v725
    %v844 = vpop.permute.xlu0 %843
    %847 = vset.pattern.permute.xlu0 0
    %848 = vperm.xlu0 %847, %v726
    %v849 = vpop.permute.xlu0 %848
    %852 = vset.pattern.permute.xlu0 0
    %853 = vperm.xlu0 %852, %v727
    %v854 = vpop.permute.xlu0 %853
    %857 = vset.pattern.permute.xlu0 0
    %858 = vperm.xlu0 %857, %v728
    %v859 = vpop.permute.xlu0 %858
    %862 = vset.pattern.permute.xlu0 0
    %863 = vperm.xlu0 %862, %v729
    %v864 = vpop.permute.xlu0 %863
    %867 = vset.pattern.permute.xlu0 0
    %868 = vperm.xlu0 %867, %v730
    %v869 = vpop.permute.xlu0 %868
    %872 = vset.pattern.permute.xlu0 0
    %873 = vperm.xlu0 %872, %v731
    %v874 = vpop.permute.xlu0 %873
    %877 = vset.pattern.permute.xlu0 0
    %878 = vperm.xlu0 %877, %v732
    %v879 = vpop.permute.xlu0 %878
    %882 = vset.pattern.permute.xlu0 0
    %883 = vperm.xlu0 %882, %v733
    %v884 = vpop.permute.xlu0 %883
    %887 = vset.pattern.permute.xlu0 0
    %888 = vperm.xlu0 %887, %v734
    %v889 = vpop.permute.xlu0 %888
    %892 = vset.pattern.permute.xlu0 0
    %893 = vperm.xlu0 %892, %v735
    %v894 = vpop.permute.xlu0 %893
    %v896 = vadd.f32 %v578, %v739
    %v897 = vadd.f32 %v581, %v744
    %v898 = vadd.f32 %v586, %v749
    %v899 = vadd.f32 %v589, %v754
    %v900 = vadd.f32 %v594, %v759
    %v901 = vadd.f32 %v597, %v764
    %v902 = vadd.f32 %v602, %v769
    %v903 = vadd.f32 %v605, %v774
    %v904 = vadd.f32 %v610, %v779
    %v905 = vadd.f32 %v613, %v784
    %v906 = vadd.f32 %v618, %v789
    %v907 = vadd.f32 %v621, %v794
    %v908 = vadd.f32 %v626, %v799
    %v909 = vadd.f32 %v629, %v804
    %v910 = vadd.f32 %v634, %v809
    %v911 = vadd.f32 %v637, %v814
    %v912 = vadd.f32 %v642, %v819
    %v913 = vadd.f32 %v645, %v824
    %v914 = vadd.f32 %v650, %v829
    %v915 = vadd.f32 %v653, %v834
    %v916 = vadd.f32 %v658, %v839
    %v917 = vadd.f32 %v661, %v844
    %v918 = vadd.f32 %v666, %v849
    %v919 = vadd.f32 %v669, %v854
    %v920 = vadd.f32 %v674, %v859
    %v921 = vadd.f32 %v677, %v864
    %v922 = vadd.f32 %v682, %v869
    %v923 = vadd.f32 %v685, %v874
    %v924 = vadd.f32 %v690, %v879
    %v925 = vadd.f32 %v693, %v884
    %v926 = vadd.f32 %v698, %v889
    %v927 = vadd.f32 %v701, %v894
    %v928 = vmax.f32 %v896, 0.0
    %v929 = vmax.f32 %v897, 0.0
    %v930 = vmax.f32 %v898, 0.0
    %v931 = vmax.f32 %v899, 0.0
    %v932 = vmax.f32 %v900, 0.0
    %v933 = vmax.f32 %v901, 0.0
    %v934 = vmax.f32 %v902, 0.0
    %v935 = vmax.f32 %v903, 0.0
    %v936 = vmax.f32 %v904, 0.0
    %v937 = vmax.f32 %v905, 0.0
    %v938 = vmax.f32 %v906, 0.0
    %v939 = vmax.f32 %v907, 0.0
    %v940 = vmax.f32 %v908, 0.0
    %v941 = vmax.f32 %v909, 0.0
    %v942 = vmax.f32 %v910, 0.0
    %v943 = vmax.f32 %v911, 0.0
    %v944 = vmax.f32 %v912, 0.0
    %v945 = vmax.f32 %v913, 0.0
    %v946 = vmax.f32 %v914, 0.0
    %v947 = vmax.f32 %v915, 0.0
    %v948 = vmax.f32 %v916, 0.0
    %v949 = vmax.f32 %v917, 0.0
    %v950 = vmax.f32 %v918, 0.0
    %v951 = vmax.f32 %v919, 0.0
    %v952 = vmax.f32 %v920, 0.0
    %v953 = vmax.f32 %v921, 0.0
    %v954 = vmax.f32 %v922, 0.0
    %v955 = vmax.f32 %v923, 0.0
    %v956 = vmax.f32 %v924, 0.0
    %v957 = vmax.f32 %v925, 0.0
    %v958 = vmax.f32 %v926, 0.0
    %v959 = vmax.f32 %v927, 0.0
    %v960 = vld [vmem:[%s5] sm:$0xff]
    %v961 = vld [vmem:[%s5 + $0x8] sm:$0xff]
    %v962 = vld [vmem:[%s5 + $0x10] sm:$0xff]
    %v963 = vld [vmem:[%s5 + $0x18] sm:$0xff]
    %v964 = vld [vmem:[%s5 + $0x20] sm:$0xff]
    %v965 = vld [vmem:[%s5 + $0x28] sm:$0xff]
    %v966 = vld [vmem:[%s5 + $0x30] sm:$0xff]
    %v967 = vld [vmem:[%s5 + $0x38] sm:$0xff]
    %v968 = vld [vmem:[%s5 + $0x40] sm:$0xff]
    %v969 = vld [vmem:[%s5 + $0x48] sm:$0xff]
    %v970 = vld [vmem:[%s5 + $0x50] sm:$0xff]
    %v971 = vld [vmem:[%s5 + $0x58] sm:$0xff]
    %v972 = vld [vmem:[%s5 + $0x60] sm:$0xff]
    %v973 = vld [vmem:[%s5 + $0x68] sm:$0xff]
    %v974 = vld [vmem:[%s5 + $0x70] sm:$0xff]
    %v975 = vld [vmem:[%s5 + $0x78] sm:$0xff]
    %v976 = vld [vmem:[%s5 + $0x80] sm:$0xff]
    %v977 = vld [vmem:[%s5 + $0x88] sm:$0xff]
    %v978 = vld [vmem:[%s5 + $0x90] sm:$0xff]
    %v979 = vld [vmem:[%s5 + $0x98] sm:$0xff]
    %v980 = vld [vmem:[%s5 + $0xa0] sm:$0xff]
    %v981 = vld [vmem:[%s5 + $0xa8] sm:$0xff]
    %v982 = vld [vmem:[%s5 + $0xb0] sm:$0xff]
    %v983 = vld [vmem:[%s5 + $0xb8] sm:$0xff]
    %v984 = vld [vmem:[%s5 + $0xc0] sm:$0xff]
    %v985 = vld [vmem:[%s5 + $0xc8] sm:$0xff]
    %v986 = vld [vmem:[%s5 + $0xd0] sm:$0xff]
    %v987 = vld [vmem:[%s5 + $0xd8] sm:$0xff]
    %v988 = vld [vmem:[%s5 + $0xe0] sm:$0xff]
    %v989 = vld [vmem:[%s5 + $0xe8] sm:$0xff]
    %v990 = vld [vmem:[%s5 + $0xf0] sm:$0xff]
    %v991 = vld [vmem:[%s5 + $0xf8] sm:$0xff]
    %v992 = vpack.c.bf16 %v929, %v928
    %v993 = vpack.c.bf16 %v931, %v930
    %v994 = vpack.c.bf16 %v933, %v932
    %v995 = vpack.c.bf16 %v935, %v934
    %v996 = vpack.c.bf16 %v937, %v936
    %v997 = vpack.c.bf16 %v939, %v938
    %v998 = vpack.c.bf16 %v941, %v940
    %v999 = vpack.c.bf16 %v943, %v942
    %v1000 = vpack.c.bf16 %v945, %v944
    %v1001 = vpack.c.bf16 %v947, %v946
    %v1002 = vpack.c.bf16 %v949, %v948
    %v1003 = vpack.c.bf16 %v951, %v950
    %v1004 = vpack.c.bf16 %v953, %v952
    %v1005 = vpack.c.bf16 %v955, %v954
    %v1006 = vpack.c.bf16 %v957, %v956
    %v1007 = vpack.c.bf16 %v959, %v958
    %v1008 = vld [vmem:[%s6] sm:$0xff]
    %v1009 = vld [vmem:[%s6 + $0x8] sm:$0xff]
    %v1010 = vld [vmem:[%s6 + $0x10] sm:$0xff]
    %v1011 = vld [vmem:[%s6 + $0x18] sm:$0xff]
    %v1012 = vld [vmem:[%s6 + $0x20] sm:$0xff]
    %v1013 = vld [vmem:[%s6 + $0x28] sm:$0xff]
    %v1014 = vld [vmem:[%s6 + $0x30] sm:$0xff]
    %v1015 = vld [vmem:[%s6 + $0x38] sm:$0xff]
    %v1016 = vld [vmem:[%s6 + $0x40] sm:$0xff]
    %v1017 = vld [vmem:[%s6 + $0x48] sm:$0xff]
    %v1018 = vld [vmem:[%s6 + $0x50] sm:$0xff]
    %v1019 = vld [vmem:[%s6 + $0x58] sm:$0xff]
    %v1020 = vld [vmem:[%s6 + $0x60] sm:$0xff]
    %v1021 = vld [vmem:[%s6 + $0x68] sm:$0xff]
    %v1022 = vld [vmem:[%s6 + $0x70] sm:$0xff]
    %v1023 = vld [vmem:[%s6 + $0x78] sm:$0xff]
    %v1024 = vld [vmem:[%s6 + $0x80] sm:$0xff]
    %v1025 = vld [vmem:[%s6 + $0x88] sm:$0xff]
    %v1026 = vld [vmem:[%s6 + $0x90] sm:$0xff]
    %v1027 = vld [vmem:[%s6 + $0x98] sm:$0xff]
    %v1028 = vld [vmem:[%s6 + $0xa0] sm:$0xff]
    %v1029 = vld [vmem:[%s6 + $0xa8] sm:$0xff]
    %v1030 = vld [vmem:[%s6 + $0xb0] sm:$0xff]
    %v1031 = vld [vmem:[%s6 + $0xb8] sm:$0xff]
    %v1032 = vld [vmem:[%s6 + $0xc0] sm:$0xff]
    %v1033 = vld [vmem:[%s6 + $0xc8] sm:$0xff]
    %v1034 = vld [vmem:[%s6 + $0xd0] sm:$0xff]
    %v1035 = vld [vmem:[%s6 + $0xd8] sm:$0xff]
    %v1036 = vld [vmem:[%s6 + $0xe0] sm:$0xff]
    %v1037 = vld [vmem:[%s6 + $0xe8] sm:$0xff]
    %v1038 = vld [vmem:[%s6 + $0xf0] sm:$0xff]
    %v1039 = vld [vmem:[%s6 + $0xf8] sm:$0xff]
    %1041 = vset.pattern.permute.xlu0 0
    %1042 = vperm.xlu0 %1041, %v1008
    %v1043 = vpop.permute.xlu0 %1042
    %1046 = vset.pattern.permute.xlu0 0
    %1047 = vperm.xlu0 %1046, %v1009
    %v1048 = vpop.permute.xlu0 %1047
    %1051 = vset.pattern.permute.xlu0 0
    %1052 = vperm.xlu0 %1051, %v1010
    %v1053 = vpop.permute.xlu0 %1052
    %1056 = vset.pattern.permute.xlu0 0
    %1057 = vperm.xlu0 %1056, %v1011
    %v1058 = vpop.permute.xlu0 %1057
    %1061 = vset.pattern.permute.xlu0 0
    %1062 = vperm.xlu0 %1061, %v1012
    %v1063 = vpop.permute.xlu0 %1062
    %1066 = vset.pattern.permute.xlu0 0
    %1067 = vperm.xlu0 %1066, %v1013
    %v1068 = vpop.permute.xlu0 %1067
    %1071 = vset.pattern.permute.xlu0 0
    %1072 = vperm.xlu0 %1071, %v1014
    %v1073 = vpop.permute.xlu0 %1072
    %1076 = vset.pattern.permute.xlu0 0
    %1077 = vperm.xlu0 %1076, %v1015
    %v1078 = vpop.permute.xlu0 %1077
    %1081 = vset.pattern.permute.xlu0 0
    %1082 = vperm.xlu0 %1081, %v1016
    %v1083 = vpop.permute.xlu0 %1082
    %1086 = vset.pattern.permute.xlu0 0
    %1087 = vperm.xlu0 %1086, %v1017
    %v1088 = vpop.permute.xlu0 %1087
    %1091 = vset.pattern.permute.xlu0 0
    %1092 = vperm.xlu0 %1091, %v1018
    %v1093 = vpop.permute.xlu0 %1092
    %1096 = vset.pattern.permute.xlu0 0
    %1097 = vperm.xlu0 %1096, %v1019
    %v1098 = vpop.permute.xlu0 %1097
    %1101 = vset.pattern.permute.xlu0 0
    %1102 = vperm.xlu0 %1101, %v1020
    %v1103 = vpop.permute.xlu0 %1102
    %1106 = vset.pattern.permute.xlu0 0
    %1107 = vperm.xlu0 %1106, %v1021
    %v1108 = vpop.permute.xlu0 %1107
    %1111 = vset.pattern.permute.xlu0 0
    %1112 = vperm.xlu0 %1111, %v1022
    %v1113 = vpop.permute.xlu0 %1112
    %1116 = vset.pattern.permute.xlu0 0
    %1117 = vperm.xlu0 %1116, %v1023
    %v1118 = vpop.permute.xlu0 %1117
    %1121 = vset.pattern.permute.xlu0 0
    %1122 = vperm.xlu0 %1121, %v1024
    %v1123 = vpop.permute.xlu0 %1122
    %1126 = vset.pattern.permute.xlu0 0
    %1127 = vperm.xlu0 %1126, %v1025
    %v1128 = vpop.permute.xlu0 %1127
    %1131 = vset.pattern.permute.xlu0 0
    %1132 = vperm.xlu0 %1131, %v1026
    %v1133 = vpop.permute.xlu0 %1132
    %1136 = vset.pattern.permute.xlu0 0
    %1137 = vperm.xlu0 %1136, %v1027
    %v1138 = vpop.permute.xlu0 %1137
    %1141 = vset.pattern.permute.xlu0 0
    %1142 = vperm.xlu0 %1141, %v1028
    %v1143 = vpop.permute.xlu0 %1142
    %1146 = vset.pattern.permute.xlu0 0
    %1147 = vperm.xlu0 %1146, %v1029
    %v1148 = vpop.permute.xlu0 %1147
    %1151 = vset.pattern.permute.xlu0 0
    %1152 = vperm.xlu0 %1151, %v1030
    %v1153 = vpop.permute.xlu0 %1152
    %1156 = vset.pattern.permute.xlu0 0
    %1157 = vperm.xlu0 %1156, %v1031
    %v1158 = vpop.permute.xlu0 %1157
    %1161 = vset.pattern.permute.xlu0 0
    %1162 = vperm.xlu0 %1161, %v1032
    %v1163 = vpop.permute.xlu0 %1162
    %1166 = vset.pattern.permute.xlu0 0
    %1167 = vperm.xlu0 %1166, %v1033
    %v1168 = vpop.permute.xlu0 %1167
    %1171 = vset.pattern.permute.xlu0 0
    %1172 = vperm.xlu0 %1171, %v1034
    %v1173 = vpop.permute.xlu0 %1172
    %1176 = vset.pattern.permute.xlu0 0
    %1177 = vperm.xlu0 %1176, %v1035
    %v1178 = vpop.permute.xlu0 %1177
    %1181 = vset.pattern.permute.xlu0 0
    %1182 = vperm.xlu0 %1181, %v1036
    %v1183 = vpop.permute.xlu0 %1182
    %1186 = vset.pattern.permute.xlu0 0
    %1187 = vperm.xlu0 %1186, %v1037
    %v1188 = vpop.permute.xlu0 %1187
    %1191 = vset.pattern.permute.xlu0 0
    %1192 = vperm.xlu0 %1191, %v1038
    %v1193 = vpop.permute.xlu0 %1192
    %1196 = vset.pattern.permute.xlu0 0
    %1197 = vperm.xlu0 %1196, %v1039
    %v1198 = vpop.permute.xlu0 %1197
    %v1232 = vunpack.c.l.b16 %v960
    %v1233 = vunpack.c.h.b16 %v960
    %v1234 = vunpack.c.l.b16 %v961
    %v1235 = vunpack.c.h.b16 %v961
    %v1236 = vunpack.c.l.b16 %v962
    %v1237 = vunpack.c.h.b16 %v962
    %v1238 = vunpack.c.l.b16 %v963
    %v1239 = vunpack.c.h.b16 %v963
    %v1240 = vunpack.c.l.b16 %v964
    %v1241 = vunpack.c.h.b16 %v964
    %v1242 = vunpack.c.l.b16 %v965
    %v1243 = vunpack.c.h.b16 %v965
    %v1244 = vunpack.c.l.b16 %v966
    %v1245 = vunpack.c.h.b16 %v966
    %v1246 = vunpack.c.l.b16 %v967
    %v1247 = vunpack.c.h.b16 %v967
    %v1248 = vunpack.c.l.b16 %v968
    %v1249 = vunpack.c.h.b16 %v968
    %v1250 = vunpack.c.l.b16 %v969
    %v1251 = vunpack.c.h.b16 %v969
    %v1252 = vunpack.c.l.b16 %v970
    %v1253 = vunpack.c.h.b16 %v970
    %v1254 = vunpack.c.l.b16 %v971
    %v1255 = vunpack.c.h.b16 %v971
    %v1256 = vunpack.c.l.b16 %v972
    %v1257 = vunpack.c.h.b16 %v972
    %v1258 = vunpack.c.l.b16 %v973
    %v1259 = vunpack.c.h.b16 %v973
    %v1260 = vunpack.c.l.b16 %v974
    %v1261 = vunpack.c.h.b16 %v974
    %v1262 = vunpack.c.l.b16 %v975
    %v1263 = vunpack.c.h.b16 %v975
    %v1264 = vunpack.c.l.b16 %v976
    %v1265 = vunpack.c.h.b16 %v976
    %v1266 = vunpack.c.l.b16 %v977
    %v1267 = vunpack.c.h.b16 %v977
    %v1268 = vunpack.c.l.b16 %v978
    %v1269 = vunpack.c.h.b16 %v978
    %v1270 = vunpack.c.l.b16 %v979
    %v1271 = vunpack.c.h.b16 %v979
    %v1272 = vunpack.c.l.b16 %v980
    %v1273 = vunpack.c.h.b16 %v980
    %v1274 = vunpack.c.l.b16 %v981
    %v1275 = vunpack.c.h.b16 %v981
    %v1276 = vunpack.c.l.b16 %v982
    %v1277 = vunpack.c.h.b16 %v982
    %v1278 = vunpack.c.l.b16 %v983
    %v1279 = vunpack.c.h.b16 %v983
    %v1280 = vunpack.c.l.b16 %v984
    %v1281 = vunpack.c.h.b16 %v984
    %v1282 = vunpack.c.l.b16 %v985
    %v1283 = vunpack.c.h.b16 %v985
    %v1284 = vunpack.c.l.b16 %v986
    %v1285 = vunpack.c.h.b16 %v986
    %v1286 = vunpack.c.l.b16 %v987
    %v1287 = vunpack.c.h.b16 %v987
    %v1288 = vunpack.c.l.b16 %v988
    %v1289 = vunpack.c.h.b16 %v988
    %v1290 = vunpack.c.l.b16 %v989
    %v1291 = vunpack.c.h.b16 %v989
    %v1292 = vunpack.c.l.b16 %v990
    %v1293 = vunpack.c.h.b16 %v990
    %v1294 = vunpack.c.l.b16 %v991
    %v1295 = vunpack.c.h.b16 %v991
    %v1296 = vpack.c.b16 %v1234, %v1232
    %v1297 = vpack.c.b16 %v1235, %v1233
    %v1298 = vpack.c.b16 %v1238, %v1236
    %v1299 = vpack.c.b16 %v1239, %v1237
    %v1300 = vpack.c.b16 %v1242, %v1240
    %v1301 = vpack.c.b16 %v1243, %v1241
    %v1302 = vpack.c.b16 %v1246, %v1244
    %v1303 = vpack.c.b16 %v1247, %v1245
    %v1304 = vpack.c.b16 %v1250, %v1248
    %v1305 = vpack.c.b16 %v1251, %v1249
    %v1306 = vpack.c.b16 %v1254, %v1252
    %v1307 = vpack.c.b16 %v1255, %v1253
    %v1308 = vpack.c.b16 %v1258, %v1256
    %v1309 = vpack.c.b16 %v1259, %v1257
    %v1310 = vpack.c.b16 %v1262, %v1260
    %v1311 = vpack.c.b16 %v1263, %v1261
    %v1312 = vpack.c.b16 %v1266, %v1264
    %v1313 = vpack.c.b16 %v1267, %v1265
    %v1314 = vpack.c.b16 %v1270, %v1268
    %v1315 = vpack.c.b16 %v1271, %v1269
    %v1316 = vpack.c.b16 %v1274, %v1272
    %v1317 = vpack.c.b16 %v1275, %v1273
    %v1318 = vpack.c.b16 %v1278, %v1276
    %v1319 = vpack.c.b16 %v1279, %v1277
    %v1320 = vpack.c.b16 %v1282, %v1280
    %v1321 = vpack.c.b16 %v1283, %v1281
    %v1322 = vpack.c.b16 %v1286, %v1284
    %v1323 = vpack.c.b16 %v1287, %v1285
    %v1324 = vpack.c.b16 %v1290, %v1288
    %v1325 = vpack.c.b16 %v1291, %v1289
    %v1326 = vpack.c.b16 %v1294, %v1292
    %v1327 = vpack.c.b16 %v1295, %v1293
    %1360 = vmatprep.subr.bf16.mxu0 0
    %1361 = vmatpush1.bf16.msra.mxu0 %v992
    %1362 = vmatprep.subr.bf16.mxu0 0
    %1363 = vmatpush1.bf16.msra.mxu0 %v993
    %1364 = vmatprep.subr.bf16.mxu0 0
    %1365 = vmatpush1.bf16.msra.mxu0 %v994
    %1366 = vmatprep.subr.bf16.mxu0 0
    %1367 = vmatpush1.bf16.msra.mxu0 %v995
    %1368 = vmatprep.subr.bf16.mxu0 0
    %1369 = vmatpush1.bf16.msra.mxu0 %v996
    %1370 = vmatprep.subr.bf16.mxu0 0
    %1371 = vmatpush1.bf16.msra.mxu0 %v997
    %1372 = vmatprep.subr.bf16.mxu0 0
    %1373 = vmatpush1.bf16.msra.mxu0 %v998
    %1374 = vmatprep.subr.bf16.mxu0 0
    %1375 = vmatpush1.bf16.msra.mxu0 %v999
    %1376 = vmatprep.subr.bf16.mxu0 0
    %1377 = vmatpush1.bf16.msra.mxu0 %v1000
    %1378 = vmatprep.subr.bf16.mxu0 0
    %1379 = vmatpush1.bf16.msra.mxu0 %v1001
    %1380 = vmatprep.subr.bf16.mxu0 0
    %1381 = vmatpush1.bf16.msra.mxu0 %v1002
    %1382 = vmatprep.subr.bf16.mxu0 0
    %1383 = vmatpush1.bf16.msra.mxu0 %v1003
    %1384 = vmatprep.subr.bf16.mxu0 0
    %1385 = vmatpush1.bf16.msra.mxu0 %v1004
    %1386 = vmatprep.subr.bf16.mxu0 0
    %1387 = vmatpush1.bf16.msra.mxu0 %v1005
    %1388 = vmatprep.subr.bf16.mxu0 0
    %1389 = vmatpush1.bf16.msra.mxu0 %v1006
    %1390 = vmatprep.subr.bf16.mxu0 0
    %1391 = vmatpush1.bf16.msra.mxu0 %v1007
    %1392 = vmatprep.mubr.bf16.mxu0 %v1297
    %1393 = vmatmul.mubr.bf16.gmra.mrb[0].mxu0 %v1296
    %v1394 = vpop.f32.mrb[0].mxu0
    %v1395 = vadd.f32 %v1043, %v1394
    %v1396 = vpop.f32.mrb[0].mxu0
    %v1397 = vpop.f32.mrb[0].mxu0
    %v1398 = vadd.f32 %v1048, %v1397
    %v1399 = vpop.f32.mrb[0].mxu0
    %1400 = vmatprep.mubr.bf16.mxu0 %v1299
    %1401 = vmatmul.mubr.bf16.gmra.mrb[0].mxu0 %v1298
    %v1402 = vpop.f32.mrb[0].mxu0
    %v1403 = vadd.f32 %v1053, %v1402
    %v1404 = vpop.f32.mrb[0].mxu0
    %v1405 = vpop.f32.mrb[0].mxu0
    %v1406 = vadd.f32 %v1058, %v1405
    %v1407 = vpop.f32.mrb[0].mxu0
    %1408 = vmatprep.mubr.bf16.mxu0 %v1301
    %1409 = vmatmul.mubr.bf16.gmra.mrb[0].mxu0 %v1300
    %v1410 = vpop.f32.mrb[0].mxu0
    %v1411 = vadd.f32 %v1063, %v1410
    %v1412 = vpop.f32.mrb[0].mxu0
    %v1413 = vpop.f32.mrb[0].mxu0
    %v1414 = vadd.f32 %v1068, %v1413
    %v1415 = vpop.f32.mrb[0].mxu0
    %1416 = vmatprep.mubr.bf16.mxu0 %v1303
    %1417 = vmatmul.mubr.bf16.gmra.mrb[0].mxu0 %v1302
    %v1418 = vpop.f32.mrb[0].mxu0
    %v1419 = vadd.f32 %v1073, %v1418
    %v1420 = vpop.f32.mrb[0].mxu0
    %v1421 = vpop.f32.mrb[0].mxu0
    %v1422 = vadd.f32 %v1078, %v1421
    %v1423 = vpop.f32.mrb[0].mxu0
    %1424 = vmatprep.mubr.bf16.mxu0 %v1305
    %1425 = vmatmul.mubr.bf16.gmra.mrb[0].mxu0 %v1304
    %v1426 = vpop.f32.mrb[0].mxu0
    %v1427 = vadd.f32 %v1083, %v1426
    %v1428 = vpop.f32.mrb[0].mxu0
    %v1429 = vpop.f32.mrb[0].mxu0
    %v1430 = vadd.f32 %v1088, %v1429
    %v1431 = vpop.f32.mrb[0].mxu0
    %1432 = vmatprep.mubr.bf16.mxu0 %v1307
    %1433 = vmatmul.mubr.bf16.gmra.mrb[0].mxu0 %v1306
    %v1434 = vpop.f32.mrb[0].mxu0
    %v1435 = vadd.f32 %v1093, %v1434
    %v1436 = vpop.f32.mrb[0].mxu0
    %v1437 = vpop.f32.mrb[0].mxu0
    %v1438 = vadd.f32 %v1098, %v1437
    %v1439 = vpop.f32.mrb[0].mxu0
    %1440 = vmatprep.mubr.bf16.mxu0 %v1309
    %1441 = vmatmul.mubr.bf16.gmra.mrb[0].mxu0 %v1308
    %v1442 = vpop.f32.mrb[0].mxu0
    %v1443 = vadd.f32 %v1103, %v1442
    %v1444 = vpop.f32.mrb[0].mxu0
    %v1445 = vpop.f32.mrb[0].mxu0
    %v1446 = vadd.f32 %v1108, %v1445
    %v1447 = vpop.f32.mrb[0].mxu0
    %1448 = vmatprep.mubr.bf16.mxu0 %v1311
    %1449 = vmatmul.mubr.bf16.gmra.mrb[0].mxu0 %v1310
    %v1450 = vpop.f32.mrb[0].mxu0
    %v1451 = vadd.f32 %v1113, %v1450
    %v1452 = vpop.f32.mrb[0].mxu0
    %v1453 = vpop.f32.mrb[0].mxu0
    %v1454 = vadd.f32 %v1118, %v1453
    %v1455 = vpop.f32.mrb[0].mxu0
    %1456 = vmatprep.mubr.bf16.mxu0 %v1313
    %1457 = vmatmul.mubr.bf16.gmra.mrb[0].mxu0 %v1312
    %v1458 = vpop.f32.mrb[0].mxu0
    %v1459 = vadd.f32 %v1123, %v1458
    %v1460 = vpop.f32.mrb[0].mxu0
    %v1461 = vpop.f32.mrb[0].mxu0
    %v1462 = vadd.f32 %v1128, %v1461
    %v1463 = vpop.f32.mrb[0].mxu0
    %1464 = vmatprep.mubr.bf16.mxu0 %v1315
    %1465 = vmatmul.mubr.bf16.gmra.mrb[0].mxu0 %v1314
    %v1466 = vpop.f32.mrb[0].mxu0
    %v1467 = vadd.f32 %v1133, %v1466
    %v1468 = vpop.f32.mrb[0].mxu0
    %v1469 = vpop.f32.mrb[0].mxu0
    %v1470 = vadd.f32 %v1138, %v1469
    %v1471 = vpop.f32.mrb[0].mxu0
    %1472 = vmatprep.mubr.bf16.mxu0 %v1317
    %1473 = vmatmul.mubr.bf16.gmra.mrb[0].mxu0 %v1316
    %v1474 = vpop.f32.mrb[0].mxu0
    %v1475 = vadd.f32 %v1143, %v1474
    %v1476 = vpop.f32.mrb[0].mxu0
    %v1477 = vpop.f32.mrb[0].mxu0
    %v1478 = vadd.f32 %v1148, %v1477
    %v1479 = vpop.f32.mrb[0].mxu0
    %1480 = vmatprep.mubr.bf16.mxu0 %v1319
    %1481 = vmatmul.mubr.bf16.gmra.mrb[0].mxu0 %v1318
    %v1482 = vpop.f32.mrb[0].mxu0
    %v1483 = vadd.f32 %v1153, %v1482
    %v1484 = vpop.f32.mrb[0].mxu0
    %v1485 = vpop.f32.mrb[0].mxu0
    %v1486 = vadd.f32 %v1158, %v1485
    %v1487 = vpop.f32.mrb[0].mxu0
    %1488 = vmatprep.mubr.bf16.mxu0 %v1321
    %1489 = vmatmul.mubr.bf16.gmra.mrb[0].mxu0 %v1320
    %v1490 = vpop.f32.mrb[0].mxu0
    %v1491 = vadd.f32 %v1163, %v1490
    %v1492 = vpop.f32.mrb[0].mxu0
    %v1493 = vpop.f32.mrb[0].mxu0
    %v1494 = vadd.f32 %v1168, %v1493
    %v1495 = vpop.f32.mrb[0].mxu0
    %1496 = vmatprep.mubr.bf16.mxu0 %v1323
    %1497 = vmatmul.mubr.bf16.gmra.mrb[0].mxu0 %v1322
    %v1498 = vpop.f32.mrb[0].mxu0
    %v1499 = vadd.f32 %v1173, %v1498
    %v1500 = vpop.f32.mrb[0].mxu0
    %v1501 = vpop.f32.mrb[0].mxu0
    %v1502 = vadd.f32 %v1178, %v1501
    %v1503 = vpop.f32.mrb[0].mxu0
    %1504 = vmatprep.mubr.bf16.mxu0 %v1325
    %1505 = vmatmul.mubr.bf16.gmra.mrb[0].mxu0 %v1324
    %v1506 = vpop.f32.mrb[0].mxu0
    %v1507 = vadd.f32 %v1183, %v1506
    %v1508 = vpop.f32.mrb[0].mxu0
    %v1509 = vpop.f32.mrb[0].mxu0
    %v1510 = vadd.f32 %v1188, %v1509
    %v1511 = vpop.f32.mrb[0].mxu0
    %1512 = vmatprep.mubr.bf16.mxu0 %v1327
    %1513 = vmatmul.mubr.bf16.gmra.mrb[0].mxu0 %v1326
    %v1514 = vpop.f32.mrb[0].mxu0
    %v1515 = vadd.f32 %v1193, %v1514
    %v1516 = vpop.f32.mrb[0].mxu0
    %v1517 = vpop.f32.mrb[0].mxu0
    %v1518 = vadd.f32 %v1198, %v1517
    %v1519 = vpop.f32.mrb[0].mxu0
    %1520 = vdwg.mxu0
    %v1521 = vmax.f32 %v1395, 0.0
    %v1522 = vmax.f32 %v1398, 0.0
    %v1523 = vmax.f32 %v1403, 0.0
    %v1524 = vmax.f32 %v1406, 0.0
    %v1525 = vmax.f32 %v1411, 0.0
    %v1526 = vmax.f32 %v1414, 0.0
    %v1527 = vmax.f32 %v1419, 0.0
    %v1528 = vmax.f32 %v1422, 0.0
    %v1529 = vmax.f32 %v1427, 0.0
    %v1530 = vmax.f32 %v1430, 0.0
    %v1531 = vmax.f32 %v1435, 0.0
    %v1532 = vmax.f32 %v1438, 0.0
    %v1533 = vmax.f32 %v1443, 0.0
    %v1534 = vmax.f32 %v1446, 0.0
    %v1535 = vmax.f32 %v1451, 0.0
    %v1536 = vmax.f32 %v1454, 0.0
    %v1537 = vmax.f32 %v1459, 0.0
    %v1538 = vmax.f32 %v1462, 0.0
    %v1539 = vmax.f32 %v1467, 0.0
    %v1540 = vmax.f32 %v1470, 0.0
    %v1541 = vmax.f32 %v1475, 0.0
    %v1542 = vmax.f32 %v1478, 0.0
    %v1543 = vmax.f32 %v1483, 0.0
    %v1544 = vmax.f32 %v1486, 0.0
    %v1545 = vmax.f32 %v1491, 0.0
    %v1546 = vmax.f32 %v1494, 0.0
    %v1547 = vmax.f32 %v1499, 0.0
    %v1548 = vmax.f32 %v1502, 0.0
    %v1549 = vmax.f32 %v1507, 0.0
    %v1550 = vmax.f32 %v1510, 0.0
    %v1551 = vmax.f32 %v1515, 0.0
    %v1552 = vmax.f32 %v1518, 0.0
    %v1553 = vld [vmem:[%s7] sm:$0xff]
    %v1554 = vld [vmem:[%s7 + $0x8] sm:$0xff]
    %v1555 = vld [vmem:[%s7 + $0x10] sm:$0xff]
    %v1556 = vld [vmem:[%s7 + $0x18] sm:$0xff]
    %v1557 = vld [vmem:[%s7 + $0x20] sm:$0xff]
    %v1558 = vld [vmem:[%s7 + $0x28] sm:$0xff]
    %v1559 = vld [vmem:[%s7 + $0x30] sm:$0xff]
    %v1560 = vld [vmem:[%s7 + $0x38] sm:$0xff]
    %v1561 = vld [vmem:[%s7 + $0x40] sm:$0xff]
    %v1562 = vld [vmem:[%s7 + $0x48] sm:$0xff]
    %v1563 = vld [vmem:[%s7 + $0x50] sm:$0xff]
    %v1564 = vld [vmem:[%s7 + $0x58] sm:$0xff]
    %v1565 = vld [vmem:[%s7 + $0x60] sm:$0xff]
    %v1566 = vld [vmem:[%s7 + $0x68] sm:$0xff]
    %v1567 = vld [vmem:[%s7 + $0x70] sm:$0xff]
    %v1568 = vld [vmem:[%s7 + $0x78] sm:$0xff]
    %v1569 = vld [vmem:[%s7 + $0x80] sm:$0xff]
    %v1570 = vld [vmem:[%s7 + $0x88] sm:$0xff]
    %v1571 = vld [vmem:[%s7 + $0x90] sm:$0xff]
    %v1572 = vld [vmem:[%s7 + $0x98] sm:$0xff]
    %v1573 = vld [vmem:[%s7 + $0xa0] sm:$0xff]
    %v1574 = vld [vmem:[%s7 + $0xa8] sm:$0xff]
    %v1575 = vld [vmem:[%s7 + $0xb0] sm:$0xff]
    %v1576 = vld [vmem:[%s7 + $0xb8] sm:$0xff]
    %v1577 = vld [vmem:[%s7 + $0xc0] sm:$0xff]
    %v1578 = vld [vmem:[%s7 + $0xc8] sm:$0xff]
    %v1579 = vld [vmem:[%s7 + $0xd0] sm:$0xff]
    %v1580 = vld [vmem:[%s7 + $0xd8] sm:$0xff]
    %v1581 = vld [vmem:[%s7 + $0xe0] sm:$0xff]
    %v1582 = vld [vmem:[%s7 + $0xe8] sm:$0xff]
    %v1583 = vld [vmem:[%s7 + $0xf0] sm:$0xff]
    %v1584 = vld [vmem:[%s7 + $0xf8] sm:$0xff]
    %1586 = vset.pattern.permute.xlu0 0
    %1587 = vperm.xlu0 %1586, %v1553
    %v1588 = vpop.permute.xlu0 %1587
    %1591 = vset.pattern.permute.xlu0 0
    %1592 = vperm.xlu0 %1591, %v1554
    %v1593 = vpop.permute.xlu0 %1592
    %1596 = vset.pattern.permute.xlu0 0
    %1597 = vperm.xlu0 %1596, %v1555
    %v1598 = vpop.permute.xlu0 %1597
    %1601 = vset.pattern.permute.xlu0 0
    %1602 = vperm.xlu0 %1601, %v1556
    %v1603 = vpop.permute.xlu0 %1602
    %1606 = vset.pattern.permute.xlu0 0
    %1607 = vperm.xlu0 %1606, %v1557
    %v1608 = vpop.permute.xlu0 %1607
    %1611 = vset.pattern.permute.xlu0 0
    %1612 = vperm.xlu0 %1611, %v1558
    %v1613 = vpop.permute.xlu0 %1612
    %1616 = vset.pattern.permute.xlu0 0
    %1617 = vperm.xlu0 %1616, %v1559
    %v1618 = vpop.permute.xlu0 %1617
    %1621 = vset.pattern.permute.xlu0 0
    %1622 = vperm.xlu0 %1621, %v1560
    %v1623 = vpop.permute.xlu0 %1622
    %1626 = vset.pattern.permute.xlu0 0
    %1627 = vperm.xlu0 %1626, %v1561
    %v1628 = vpop.permute.xlu0 %1627
    %1631 = vset.pattern.permute.xlu0 0
    %1632 = vperm.xlu0 %1631, %v1562
    %v1633 = vpop.permute.xlu0 %1632
    %1636 = vset.pattern.permute.xlu0 0
    %1637 = vperm.xlu0 %1636, %v1563
    %v1638 = vpop.permute.xlu0 %1637
    %1641 = vset.pattern.permute.xlu0 0
    %1642 = vperm.xlu0 %1641, %v1564
    %v1643 = vpop.permute.xlu0 %1642
    %1646 = vset.pattern.permute.xlu0 0
    %1647 = vperm.xlu0 %1646, %v1565
    %v1648 = vpop.permute.xlu0 %1647
    %1651 = vset.pattern.permute.xlu0 0
    %1652 = vperm.xlu0 %1651, %v1566
    %v1653 = vpop.permute.xlu0 %1652
    %1656 = vset.pattern.permute.xlu0 0
    %1657 = vperm.xlu0 %1656, %v1567
    %v1658 = vpop.permute.xlu0 %1657
    %1661 = vset.pattern.permute.xlu0 0
    %1662 = vperm.xlu0 %1661, %v1568
    %v1663 = vpop.permute.xlu0 %1662
    %1666 = vset.pattern.permute.xlu0 0
    %1667 = vperm.xlu0 %1666, %v1569
    %v1668 = vpop.permute.xlu0 %1667
    %1671 = vset.pattern.permute.xlu0 0
    %1672 = vperm.xlu0 %1671, %v1570
    %v1673 = vpop.permute.xlu0 %1672
    %1676 = vset.pattern.permute.xlu0 0
    %1677 = vperm.xlu0 %1676, %v1571
    %v1678 = vpop.permute.xlu0 %1677
    %1681 = vset.pattern.permute.xlu0 0
    %1682 = vperm.xlu0 %1681, %v1572
    %v1683 = vpop.permute.xlu0 %1682
    %1686 = vset.pattern.permute.xlu0 0
    %1687 = vperm.xlu0 %1686, %v1573
    %v1688 = vpop.permute.xlu0 %1687
    %1691 = vset.pattern.permute.xlu0 0
    %1692 = vperm.xlu0 %1691, %v1574
    %v1693 = vpop.permute.xlu0 %1692
    %1696 = vset.pattern.permute.xlu0 0
    %1697 = vperm.xlu0 %1696, %v1575
    %v1698 = vpop.permute.xlu0 %1697
    %1701 = vset.pattern.permute.xlu0 0
    %1702 = vperm.xlu0 %1701, %v1576
    %v1703 = vpop.permute.xlu0 %1702
    %1706 = vset.pattern.permute.xlu0 0
    %1707 = vperm.xlu0 %1706, %v1577
    %v1708 = vpop.permute.xlu0 %1707
    %1711 = vset.pattern.permute.xlu0 0
    %1712 = vperm.xlu0 %1711, %v1578
    %v1713 = vpop.permute.xlu0 %1712
    %1716 = vset.pattern.permute.xlu0 0
    %1717 = vperm.xlu0 %1716, %v1579
    %v1718 = vpop.permute.xlu0 %1717
    %1721 = vset.pattern.permute.xlu0 0
    %1722 = vperm.xlu0 %1721, %v1580
    %v1723 = vpop.permute.xlu0 %1722
    %1726 = vset.pattern.permute.xlu0 0
    %1727 = vperm.xlu0 %1726, %v1581
    %v1728 = vpop.permute.xlu0 %1727
    %1731 = vset.pattern.permute.xlu0 0
    %1732 = vperm.xlu0 %1731, %v1582
    %v1733 = vpop.permute.xlu0 %1732
    %1736 = vset.pattern.permute.xlu0 0
    %1737 = vperm.xlu0 %1736, %v1583
    %v1738 = vpop.permute.xlu0 %1737
    %1741 = vset.pattern.permute.xlu0 0
    %1742 = vperm.xlu0 %1741, %v1584
    %v1743 = vpop.permute.xlu0 %1742
    %v1745 = vmul.f32 %v1521, %v1588
    %v1746 = vmul.f32 %v1522, %v1593
    %v1747 = vmul.f32 %v1523, %v1598
    %v1748 = vmul.f32 %v1524, %v1603
    %v1749 = vmul.f32 %v1525, %v1608
    %v1750 = vmul.f32 %v1526, %v1613
    %v1751 = vmul.f32 %v1527, %v1618
    %v1752 = vmul.f32 %v1528, %v1623
    %v1753 = vmul.f32 %v1529, %v1628
    %v1754 = vmul.f32 %v1530, %v1633
    %v1755 = vmul.f32 %v1531, %v1638
    %v1756 = vmul.f32 %v1532, %v1643
    %v1757 = vmul.f32 %v1533, %v1648
    %v1758 = vmul.f32 %v1534, %v1653
    %v1759 = vmul.f32 %v1535, %v1658
    %v1760 = vmul.f32 %v1536, %v1663
    %v1761 = vmul.f32 %v1537, %v1668
    %v1762 = vmul.f32 %v1538, %v1673
    %v1763 = vmul.f32 %v1539, %v1678
    %v1764 = vmul.f32 %v1540, %v1683
    %v1765 = vmul.f32 %v1541, %v1688
    %v1766 = vmul.f32 %v1542, %v1693
    %v1767 = vmul.f32 %v1543, %v1698
    %v1768 = vmul.f32 %v1544, %v1703
    %v1769 = vmul.f32 %v1545, %v1708
    %v1770 = vmul.f32 %v1546, %v1713
    %v1771 = vmul.f32 %v1547, %v1718
    %v1772 = vmul.f32 %v1548, %v1723
    %v1773 = vmul.f32 %v1549, %v1728
    %v1774 = vmul.f32 %v1550, %v1733
    %v1775 = vmul.f32 %v1551, %v1738
    %v1776 = vmul.f32 %v1552, %v1743
    %v1777 = vadd.f32 %v1745, %v1746
    %v1778 = vadd.f32 %v1777, %v1747
    %v1779 = vadd.f32 %v1778, %v1748
    %v1780 = vadd.f32 %v1779, %v1749
    %v1781 = vadd.f32 %v1780, %v1750
    %v1782 = vadd.f32 %v1781, %v1751
    %v1783 = vadd.f32 %v1782, %v1752
    %v1784 = vadd.f32 %v1783, %v1753
    %v1785 = vadd.f32 %v1784, %v1754
    %v1786 = vadd.f32 %v1785, %v1755
    %v1787 = vadd.f32 %v1786, %v1756
    %v1788 = vadd.f32 %v1787, %v1757
    %v1789 = vadd.f32 %v1788, %v1758
    %v1790 = vadd.f32 %v1789, %v1759
    %v1791 = vadd.f32 %v1790, %v1760
    %v1792 = vadd.f32 %v1791, %v1761
    %v1793 = vadd.f32 %v1792, %v1762
    %v1794 = vadd.f32 %v1793, %v1763
    %v1795 = vadd.f32 %v1794, %v1764
    %v1796 = vadd.f32 %v1795, %v1765
    %v1797 = vadd.f32 %v1796, %v1766
    %v1798 = vadd.f32 %v1797, %v1767
    %v1799 = vadd.f32 %v1798, %v1768
    %v1800 = vadd.f32 %v1799, %v1769
    %v1801 = vadd.f32 %v1800, %v1770
    %v1802 = vadd.f32 %v1801, %v1771
    %v1803 = vadd.f32 %v1802, %v1772
    %v1804 = vadd.f32 %v1803, %v1773
    %v1805 = vadd.f32 %v1804, %v1774
    %v1806 = vadd.f32 %v1805, %v1775
    %v1807 = vadd.f32 %v1806, %v1776
    %v1808 = vrot.slane %v1807, 4
    %v1809 = vadd.f32 %v1807, %v1808
    %v1810 = vrot.slane %v1809, 2
    %v1811 = vadd.f32 %v1809, %v1810
    %v1812 = vrot.slane %v1811, 1
    %v1813 = vadd.f32 %v1811, %v1812
    %v1814 = vld [vmem:[#allocation2] sm:$0x1]
    %1816 = vset.pattern.permute.xlu0 0
    %1817 = vperm.xlu0 %1816, %v1814
    %v1818 = vpop.permute.xlu0 %1817
    %v1820 = vlaneseq
    %v1821 = vshrl.u32 %v1820, 7
    %v1822 = vsub.s32 0, %v1821
    %v1823 = vrot.slane %v1818, %v1822
    %v1824 = vadd.f32 %v1813, %v1823
    %1825 = vst [vmem:[#allocation3] sm:$0x1] %v1824
    // Predicated region
    $region38: #{tpu_custom_call.1} parent=1 // pred_check
      _
    $region39: #{tpu_custom_call.1} parent=1 // pred_check_branch
      %1827 = sbr.rel (0) target = $region41
    $region40: #{tpu_custom_call.1} parent=1 // pred_region
      %s1829 = ssub.s32 16, 16
      %1830 = vsyncadd [#allocation4], %s1829
      %s1832 = sshll.u32 [#allocation3], 4
      %s1833 = int_to_ptr.vmem [resolvable:$true] %s1832
      %1835 = dma.vmem_to_hbm [thread:$0]  %s1833, 16, %s9, [#allocation4]
    $region41: #{tpu_custom_call.1} parent=1 // pred_fallthru
      _
    // Predicated region
    $region42: #{tpu_custom_call.1} parent=1 // pred_check
      _
    $region43: #{tpu_custom_call.1} parent=1 // pred_check_branch
      %1837 = sbr.rel (0) target = $region45
    $region44: #{tpu_custom_call.1} parent=1 // pred_region
      %1838 = dma.done [#allocation4], 16
    $region45: #{tpu_custom_call.1} parent=1 // pred_fallthru
      _
    %1839 = vsyncpa [#allocation4], 1

</llo_original>
